<compile_context>
chip_gen: v7x
topology: tpu7x:2x2x1
jax: 0.10.0
libtpu: 0.0.40
codegen_flags: <defaults>
</compile_context>

<pallas_src>
import numpy as np
import jax
import jax.numpy as jnp
from jax.experimental import pallas as pl
from jax.experimental.pallas import tpu as pltpu


_GAMMA = 64.0
_NEG_TOPK = 10
_NEG_TOPK_THRESHOLD = 20


def _ranking_loss_kernel(sim_ref, label_ref, out_ref):
    sim = sim_ref[...].astype(jnp.float32)      # (TB, Np)  in-kernel cast
    label = label_ref[...].astype(jnp.float32)  # (TB, Np)
    TB, Np = sim.shape
    NC = Np // 128
    neg_inf = jnp.float32(-jnp.inf)

    # Hoisted MXU operand (broadcast is NOT CSE'd by JAX -> build it once).
    ones_mxu = jnp.ones((Np, 128), jnp.float32)

    def lane_sum(x):  # (TB, Np) f32 -> (TB, 1); runs on the (idle) MXU
        return jnp.dot(x, ones_mxu, preferred_element_type=jnp.float32)[:, 0:1]

    def lane_max(x):  # (TB, Np) f32 -> (TB, 1); VPU chunk-combine + 1 XLU reduce
        acc = x[:, 0:128]
        for c in range(1, NC):
            acc = jnp.maximum(acc, x[:, c * 128:(c + 1) * 128])
        return jnp.max(acc, axis=-1, keepdims=True)

    # ---- positives: masked logsumexp ----------------------------------------
    pos_mask = label > 0.5
    logit_p = -jnp.maximum(0.8 - sim, 0.0) * (sim - 0.8) * _GAMMA
    pos_count = lane_sum(pos_mask.astype(jnp.float32))
    has_pos = pos_count > 0.0

    masked_p = jnp.where(pos_mask, logit_p, neg_inf)
    max_p = lane_max(masked_p)
    safe_max_p = jnp.where(has_pos, max_p, 0.0)
    # use where (not mask-multiply): exp at masked positions may be +inf
    exp_p = jnp.where(pos_mask, jnp.exp(logit_p - safe_max_p), 0.0)
    sum_p = lane_sum(exp_p)
    # no positives -> torch uses logit_p = [0] -> logsumexp = 0
    lse_p = jnp.where(has_pos, safe_max_p + jnp.log(sum_p), 0.0)

    # ---- negatives, path A: all negatives -----------------------------------
    neg_mask = label < 0.25
    logit_n = jnp.maximum(sim - 0.2, 0.0) * (sim - 0.2) * _GAMMA
    neg_count = lane_sum(neg_mask.astype(jnp.float32))
    has_neg = neg_count > 0.0
    use_topk = neg_count > float(_NEG_TOPK_THRESHOLD)

    masked_n = jnp.where(neg_mask, logit_n, neg_inf)
    max_n = lane_max(masked_n)
    safe_max_n = jnp.where(has_neg, max_n, 0.0)
    exp_n = jnp.where(neg_mask, jnp.exp(logit_n - safe_max_n), 0.0)
    sum_n = lane_sum(exp_n)
    lse_n_all = jnp.where(has_neg, safe_max_n + jnp.log(sum_n), neg_inf)

    # ---- negatives, path B: top-10 by sim (only used when #neg > 20) --------
    # Online logsumexp over (value, multiplicity) pairs: per iteration take the
    # row max (single XLU reduce), count its ties on the MXU, keep
    # min(ties, 10 - kept) copies and remove all copies of that value.
    # logit_n is monotone non-decreasing in sim, so the first max's logit is the
    # logsumexp max, and the kept multiset matches torch.topk(10) exactly
    # (including ties crossing the boundary).
    work = jnp.where(neg_mask, sim, neg_inf)
    kept = jnp.zeros((TB, 1), jnp.float32)
    sum_topk = jnp.zeros((TB, 1), jnp.float32)
    max_logit_topk = jnp.zeros((TB, 1), jnp.float32)

    for it in range(_NEG_TOPK):
        m = lane_max(work)                           # (TB, 1), 1 XLU reduce
        eq = work == m                               # VPU compare (ties of m)
        c = lane_sum(eq.astype(jnp.float32))         # MXU
        n_keep = jnp.minimum(c, float(_NEG_TOPK) - kept)
        lg = jnp.maximum(m - 0.2, 0.0) * (m - 0.2) * _GAMMA
        if it == 0:
            max_logit_topk = lg                      # finite whenever use_topk
            contrib = n_keep                         # n_keep * exp(0)
        else:
            contrib = jnp.where(n_keep > 0.0,
                                n_keep * jnp.exp(lg - max_logit_topk), 0.0)
        sum_topk = sum_topk + contrib
        kept = kept + n_keep
        work = jnp.where(eq, neg_inf, work)          # drop all copies of m

    lse_n_topk = max_logit_topk + jnp.log(sum_topk)
    lse_n = jnp.where(use_topk, lse_n_topk, lse_n_all)

    # ---- stable softplus + per-block partial sum -----------------------------
    z = lse_n + lse_p                                        # (TB, 1)
    loss_row = jnp.maximum(z, 0.0) + jnp.log1p(jnp.exp(-jnp.abs(z)))
    block_sum = jnp.sum(loss_row, axis=0, keepdims=True)     # (1, 1)
    out_ref[...] = jnp.broadcast_to(block_sum, (8, 128))     # lane-dense store


def _round_up(x, m):
    return ((x + m - 1) // m) * m


def ranking_loss(sim, label):
    """sim, label: (B, N) float arrays. Returns scalar f32 loss (reduction='mean')."""
    assert sim.shape == label.shape and sim.ndim == 2
    B, N = sim.shape

    # Pad candidate axis to a lane-dense multiple of 128; pads get a neutral
    # label (0.4) so both masks reject them.
    Np = _round_up(max(N, 1), 128)

    # Row-tile: multiple of 8, sized so ~28 live (TB, Np) f32 slabs (double-
    # buffered inputs + unrolled top-k temporaries) stay well under the 32 MiB
    # scoped-VMEM budget we request (safe on v5e / v6e / v7x).
    vmem_budget = 12 * 1024 * 1024
    per_row_bytes = Np * 4 * 28
    tb = max(8, min(512, (vmem_budget // per_row_bytes) // 8 * 8))
    tb = min(tb, _round_up(B, 8))
    Bp = _round_up(B, tb)
    num_blocks = Bp // tb

    pad_b, pad_n = Bp - B, Np - N
    if pad_b or pad_n:
        sim_p = jnp.pad(sim, ((0, pad_b), (0, pad_n)))
        label_p = jnp.pad(label, ((0, pad_b), (0, pad_n)), constant_values=0.4)
    else:
        sim_p, label_p = sim, label

    n_lane_sums = 4 + _NEG_TOPK
    cost = pl.CostEstimate(
        flops=int(Bp * Np * (40 + n_lane_sums * 2 * 128)),
        transcendentals=int(2 * Bp * Np + 16 * Bp),
        bytes_accessed=int(sim_p.size * sim_p.dtype.itemsize
                           + label_p.size * label_p.dtype.itemsize
                           + num_blocks * 8 * 128 * 4),
    )

    out = pl.pallas_call(
        _ranking_loss_kernel,
        out_shape=jax.ShapeDtypeStruct((num_blocks * 8, 128), jnp.float32),
        grid_spec=pltpu.PrefetchScalarGridSpec(
            num_scalar_prefetch=0,
            grid=(num_blocks,),
            in_specs=[pl.BlockSpec((tb, Np), lambda i: (i, 0)),
                      pl.BlockSpec((tb, Np), lambda i: (i, 0))],
            out_specs=pl.BlockSpec((8, 128), lambda i: (i, 0)),
        ),
        compiler_params=pltpu.CompilerParams(
            dimension_semantics=("parallel",),
            vmem_limit_bytes=32 * 1024 * 1024),
        cost_estimate=cost,
    )(sim_p, label_p)

    per_block = out.reshape(num_blocks, 8, 128)[:, 0, 0]   # one value per block
    return jnp.sum(per_block) / jnp.float32(B)


# ---------------- pure-numpy reference mirroring the torch loop ---------------
def _np_logsumexp(x):
    m = np.max(x)
    return m + np.log(np.sum(np.exp(x - m)))


def reference_loss(sim, label):
    sim = np.asarray(sim, np.float32)
    label = np.asarray(label, np.float32)
    B = label.shape[0]
    total = 0.0
    for i in range(B):
        pos = sim[i][label[i] > 0.5]
        if pos.shape[0] > 0:
            logit_p = -np.clip(0.8 - pos, 0.0, None) * (pos - 0.8) * 64.0
        else:
            logit_p = np.zeros(1, np.float32)
        neg = sim[i][label[i] < 0.25]
        if neg.shape[0] > 20:
            neg = np.sort(neg)[-10:]
        logit_n = np.clip(neg - 0.2, 0.0, None) * (neg - 0.2) * 64.0
        lse_n = _np_logsumexp(logit_n) if neg.size > 0 else -np.inf
        lse_p = _np_logsumexp(logit_p)
        z = lse_n + lse_p
        total += max(z, 0.0) + np.log1p(np.exp(-abs(z)))
    return total / B


if __name__ == "__main__":
    B, N = 3, 64
    key = jax.random.PRNGKey(0)
    sim = jax.random.uniform(key, (B, N), dtype=jnp.float32)

    # Deterministic labels:
    #  row 0: 4 positives, 40 negatives (>20 -> exercises the top-10 path)
    #  row 1: 3 positives,  8 negatives (<=20 -> uses all negatives)
    #  row 2: 0 positives,  5 negatives (exercises the "no positives" path)
    row0 = np.concatenate([np.full(4, 0.9), np.full(40, 0.1), np.full(N - 44, 0.4)])
    row1 = np.concatenate([np.full(3, 0.9), np.full(8, 0.1), np.full(N - 11, 0.4)])
    row2 = np.concatenate([np.full(5, 0.1), np.full(N - 5, 0.4)])
    label = jnp.asarray(np.stack([row0, row1, row2]).astype(np.float32))

    loss = jax.block_until_ready(ranking_loss(sim, label))

    ref = reference_loss(np.asarray(sim), np.asarray(label))
    assert np.allclose(float(loss), float(ref), rtol=1e-3, atol=1e-3), (float(loss), float(ref))

    print("KERNEL_OK")
</pallas_src>

<mosaic_0001>
module attributes {stable_mosaic.version = 11 : i64} {
  func.func @_ranking_loss_kernel(%arg0: i32, %arg1: memref<8x128xf32, #tpu.memory_space<vmem>>, %arg2: memref<8x128xf32, #tpu.memory_space<vmem>>, %arg3: memref<8x128xf32, #tpu.memory_space<vmem>>) attributes {dimension_semantics = [#tpu.dimension_semantics<parallel>], iteration_bounds = array<i64: 1>, scalar_prefetch = 0 : i64, scratch_operands = 0 : i64, tpu.core_type = #tpu.core_type<tc>, window_params = [{transform_indices = @transform_0, window_bounds = array<i64: 8, 128>}, {transform_indices = @transform_1, window_bounds = array<i64: 8, 128>}, {transform_indices = @transform_2, window_bounds = array<i64: 8, 128>}]} {
    %c0 = arith.constant 0 : index
    %c0_0 = arith.constant 0 : index
    %0 = vector.load %arg1[%c0, %c0_0] : memref<8x128xf32, #tpu.memory_space<vmem>>, vector<8x128xf32>
    %c0_1 = arith.constant 0 : index
    %c0_2 = arith.constant 0 : index
    %1 = vector.load %arg2[%c0_1, %c0_2] : memref<8x128xf32, #tpu.memory_space<vmem>>, vector<8x128xf32>
    %cst = arith.constant 1.000000e+00 : f32
    %2 = vector.broadcast %cst : f32 to vector<128x128xf32>
    %cst_3 = arith.constant 5.000000e-01 : f32
    %3 = vector.broadcast %cst_3 : f32 to vector<8x128xf32>
    %4 = arith.cmpf ogt, %1, %3 : vector<8x128xf32>
    %cst_4 = arith.constant 8.000000e-01 : f32
    %5 = vector.broadcast %cst_4 : f32 to vector<8x128xf32>
    %6 = arith.subf %5, %0 : vector<8x128xf32>
    %cst_5 = arith.constant 0.000000e+00 : f32
    %7 = vector.broadcast %cst_5 : f32 to vector<8x128xf32>
    %8 = arith.maximumf %6, %7 : vector<8x128xf32>
    %cst_6 = arith.constant 0.000000e+00 : f32
    %9 = vector.broadcast %cst_6 : f32 to vector<8x128xf32>
    %10 = arith.subf %9, %8 : vector<8x128xf32>
    %cst_7 = arith.constant 8.000000e-01 : f32
    %11 = vector.broadcast %cst_7 : f32 to vector<8x128xf32>
    %12 = arith.subf %0, %11 : vector<8x128xf32>
    %13 = arith.mulf %10, %12 : vector<8x128xf32>
    %cst_8 = arith.constant 6.400000e+01 : f32
    %14 = vector.broadcast %cst_8 : f32 to vector<8x128xf32>
    %15 = arith.mulf %13, %14 : vector<8x128xf32>
    %16 = arith.extui %4 : vector<8x128xi1> to vector<8x128xi32>
    %17 = arith.sitofp %16 : vector<8x128xi32> to vector<8x128xf32>
    %cst_9 = arith.constant dense<0.000000e+00> : vector<8x128xf32>
    %18 = tpu.matmul %17, %2, %cst_9 {dimension_numbers = #tpu.dot_dimension_numbers<[1], [0], [0], [1], [0, 0, 1, 1], [], []>} : vector<8x128xf32>, vector<128x128xf32>, vector<8x128xf32> -> vector<8x128xf32>
    %19 = vector.extract_strided_slice %18 {offsets = [0, 0], sizes = [8, 1], strides = [1, 1]} : vector<8x128xf32> to vector<8x1xf32>
    %cst_10 = arith.constant 0.000000e+00 : f32
    %20 = vector.broadcast %cst_10 : f32 to vector<8x1xf32>
    %21 = arith.cmpf ogt, %19, %20 : vector<8x1xf32>
    %cst_11 = arith.constant 0xFF800000 : f32
    %22 = vector.broadcast %cst_11 : f32 to vector<8x128xf32>
    %23 = arith.select %4, %15, %22 : vector<8x128xi1>, vector<8x128xf32>
    %cst_12 = arith.constant dense<0xFF800000> : vector<8xf32>
    %24 = vector.multi_reduction <maximumf>, %23, %cst_12 [1] : vector<8x128xf32> to vector<8xf32>
    %25 = vector.shape_cast %24 : vector<8xf32> to vector<8x1xf32>
    %cst_13 = arith.constant 0.000000e+00 : f32
    %26 = vector.broadcast %cst_13 : f32 to vector<8x1xf32>
    %27 = arith.select %21, %25, %26 : vector<8x1xi1>, vector<8x1xf32>
    %28 = vector.broadcast %27 : vector<8x1xf32> to vector<8x128xf32>
    %29 = arith.subf %15, %28 : vector<8x128xf32>
    %30 = math.exp %29 : vector<8x128xf32>
    %cst_14 = arith.constant 0.000000e+00 : f32
    %31 = vector.broadcast %cst_14 : f32 to vector<8x128xf32>
    %32 = arith.select %4, %30, %31 : vector<8x128xi1>, vector<8x128xf32>
    %cst_15 = arith.constant dense<0.000000e+00> : vector<8x128xf32>
    %33 = tpu.matmul %32, %2, %cst_15 {dimension_numbers = #tpu.dot_dimension_numbers<[1], [0], [0], [1], [0, 0, 1, 1], [], []>} : vector<8x128xf32>, vector<128x128xf32>, vector<8x128xf32> -> vector<8x128xf32>
    %34 = vector.extract_strided_slice %33 {offsets = [0, 0], sizes = [8, 1], strides = [1, 1]} : vector<8x128xf32> to vector<8x1xf32>
    %35 = math.log %34 : vector<8x1xf32>
    %36 = arith.addf %27, %35 : vector<8x1xf32>
    %cst_16 = arith.constant 0.000000e+00 : f32
    %37 = vector.broadcast %cst_16 : f32 to vector<8x1xf32>
    %38 = arith.select %21, %36, %37 : vector<8x1xi1>, vector<8x1xf32>
    %cst_17 = arith.constant 2.500000e-01 : f32
    %39 = vector.broadcast %cst_17 : f32 to vector<8x128xf32>
    %40 = arith.cmpf olt, %1, %39 : vector<8x128xf32>
    %cst_18 = arith.constant 2.000000e-01 : f32
    %41 = vector.broadcast %cst_18 : f32 to vector<8x128xf32>
    %42 = arith.subf %0, %41 : vector<8x128xf32>
    %cst_19 = arith.constant 0.000000e+00 : f32
    %43 = vector.broadcast %cst_19 : f32 to vector<8x128xf32>
    %44 = arith.maximumf %42, %43 : vector<8x128xf32>
    %cst_20 = arith.constant 2.000000e-01 : f32
    %45 = vector.broadcast %cst_20 : f32 to vector<8x128xf32>
    %46 = arith.subf %0, %45 : vector<8x128xf32>
    %47 = arith.mulf %44, %46 : vector<8x128xf32>
    %cst_21 = arith.constant 6.400000e+01 : f32
    %48 = vector.broadcast %cst_21 : f32 to vector<8x128xf32>
    %49 = arith.mulf %47, %48 : vector<8x128xf32>
    %50 = arith.extui %40 : vector<8x128xi1> to vector<8x128xi32>
    %51 = arith.sitofp %50 : vector<8x128xi32> to vector<8x128xf32>
    %cst_22 = arith.constant dense<0.000000e+00> : vector<8x128xf32>
    %52 = tpu.matmul %51, %2, %cst_22 {dimension_numbers = #tpu.dot_dimension_numbers<[1], [0], [0], [1], [0, 0, 1, 1], [], []>} : vector<8x128xf32>, vector<128x128xf32>, vector<8x128xf32> -> vector<8x128xf32>
    %53 = vector.extract_strided_slice %52 {offsets = [0, 0], sizes = [8, 1], strides = [1, 1]} : vector<8x128xf32> to vector<8x1xf32>
    %cst_23 = arith.constant 0.000000e+00 : f32
    %54 = vector.broadcast %cst_23 : f32 to vector<8x1xf32>
    %55 = arith.cmpf ogt, %53, %54 : vector<8x1xf32>
    %cst_24 = arith.constant 2.000000e+01 : f32
    %56 = vector.broadcast %cst_24 : f32 to vector<8x1xf32>
    %57 = arith.cmpf ogt, %53, %56 : vector<8x1xf32>
    %cst_25 = arith.constant 0xFF800000 : f32
    %58 = vector.broadcast %cst_25 : f32 to vector<8x128xf32>
    %59 = arith.select %40, %49, %58 : vector<8x128xi1>, vector<8x128xf32>
    %cst_26 = arith.constant dense<0xFF800000> : vector<8xf32>
    %60 = vector.multi_reduction <maximumf>, %59, %cst_26 [1] : vector<8x128xf32> to vector<8xf32>
    %61 = vector.shape_cast %60 : vector<8xf32> to vector<8x1xf32>
    %cst_27 = arith.constant 0.000000e+00 : f32
    %62 = vector.broadcast %cst_27 : f32 to vector<8x1xf32>
    %63 = arith.select %55, %61, %62 : vector<8x1xi1>, vector<8x1xf32>
    %64 = vector.broadcast %63 : vector<8x1xf32> to vector<8x128xf32>
    %65 = arith.subf %49, %64 : vector<8x128xf32>
    %66 = math.exp %65 : vector<8x128xf32>
    %cst_28 = arith.constant 0.000000e+00 : f32
    %67 = vector.broadcast %cst_28 : f32 to vector<8x128xf32>
    %68 = arith.select %40, %66, %67 : vector<8x128xi1>, vector<8x128xf32>
    %cst_29 = arith.constant dense<0.000000e+00> : vector<8x128xf32>
    %69 = tpu.matmul %68, %2, %cst_29 {dimension_numbers = #tpu.dot_dimension_numbers<[1], [0], [0], [1], [0, 0, 1, 1], [], []>} : vector<8x128xf32>, vector<128x128xf32>, vector<8x128xf32> -> vector<8x128xf32>
    %70 = vector.extract_strided_slice %69 {offsets = [0, 0], sizes = [8, 1], strides = [1, 1]} : vector<8x128xf32> to vector<8x1xf32>
    %71 = math.log %70 : vector<8x1xf32>
    %72 = arith.addf %63, %71 : vector<8x1xf32>
    %cst_30 = arith.constant 0xFF800000 : f32
    %73 = vector.broadcast %cst_30 : f32 to vector<8x1xf32>
    %74 = arith.select %55, %72, %73 : vector<8x1xi1>, vector<8x1xf32>
    %cst_31 = arith.constant 0xFF800000 : f32
    %75 = vector.broadcast %cst_31 : f32 to vector<8x128xf32>
    %76 = arith.select %40, %0, %75 : vector<8x128xi1>, vector<8x128xf32>
    %cst_32 = arith.constant 0.000000e+00 : f32
    %77 = vector.broadcast %cst_32 : f32 to vector<8x1xf32>
    %cst_33 = arith.constant 0.000000e+00 : f32
    %78 = vector.broadcast %cst_33 : f32 to vector<8x1xf32>
    %cst_34 = arith.constant dense<0xFF800000> : vector<8xf32>
    %79 = vector.multi_reduction <maximumf>, %76, %cst_34 [1] : vector<8x128xf32> to vector<8xf32>
    %80 = vector.shape_cast %79 : vector<8xf32> to vector<8x1xf32>
    %81 = vector.broadcast %80 : vector<8x1xf32> to vector<8x128xf32>
    %82 = arith.cmpf oeq, %76, %81 : vector<8x128xf32>
    %83 = arith.extui %82 : vector<8x128xi1> to vector<8x128xi32>
    %84 = arith.sitofp %83 : vector<8x128xi32> to vector<8x128xf32>
    %cst_35 = arith.constant dense<0.000000e+00> : vector<8x128xf32>
    %85 = tpu.matmul %84, %2, %cst_35 {dimension_numbers = #tpu.dot_dimension_numbers<[1], [0], [0], [1], [0, 0, 1, 1], [], []>} : vector<8x128xf32>, vector<128x128xf32>, vector<8x128xf32> -> vector<8x128xf32>
    %86 = vector.extract_strided_slice %85 {offsets = [0, 0], sizes = [8, 1], strides = [1, 1]} : vector<8x128xf32> to vector<8x1xf32>
    %cst_36 = arith.constant 1.000000e+01 : f32
    %87 = vector.broadcast %cst_36 : f32 to vector<8x1xf32>
    %88 = arith.subf %87, %77 : vector<8x1xf32>
    %89 = arith.minimumf %86, %88 : vector<8x1xf32>
    %cst_37 = arith.constant 2.000000e-01 : f32
    %90 = vector.broadcast %cst_37 : f32 to vector<8x1xf32>
    %91 = arith.subf %80, %90 : vector<8x1xf32>
    %cst_38 = arith.constant 0.000000e+00 : f32
    %92 = vector.broadcast %cst_38 : f32 to vector<8x1xf32>
    %93 = arith.maximumf %91, %92 : vector<8x1xf32>
    %cst_39 = arith.constant 2.000000e-01 : f32
    %94 = vector.broadcast %cst_39 : f32 to vector<8x1xf32>
    %95 = arith.subf %80, %94 : vector<8x1xf32>
    %96 = arith.mulf %93, %95 : vector<8x1xf32>
    %cst_40 = arith.constant 6.400000e+01 : f32
    %97 = vector.broadcast %cst_40 : f32 to vector<8x1xf32>
    %98 = arith.mulf %96, %97 : vector<8x1xf32>
    %99 = arith.addf %78, %89 : vector<8x1xf32>
    %100 = arith.addf %77, %89 : vector<8x1xf32>
    %cst_41 = arith.constant 0xFF800000 : f32
    %101 = vector.broadcast %cst_41 : f32 to vector<8x128xf32>
    %102 = arith.select %82, %101, %76 : vector<8x128xi1>, vector<8x128xf32>
    %cst_42 = arith.constant dense<0xFF800000> : vector<8xf32>
    %103 = vector.multi_reduction <maximumf>, %102, %cst_42 [1] : vector<8x128xf32> to vector<8xf32>
    %104 = vector.shape_cast %103 : vector<8xf32> to vector<8x1xf32>
    %105 = vector.broadcast %104 : vector<8x1xf32> to vector<8x128xf32>
    %106 = arith.cmpf oeq, %102, %105 : vector<8x128xf32>
    %107 = arith.extui %106 : vector<8x128xi1> to vector<8x128xi32>
    %108 = arith.sitofp %107 : vector<8x128xi32> to vector<8x128xf32>
    %cst_43 = arith.constant dense<0.000000e+00> : vector<8x128xf32>
    %109 = tpu.matmul %108, %2, %cst_43 {dimension_numbers = #tpu.dot_dimension_numbers<[1], [0], [0], [1], [0, 0, 1, 1], [], []>} : vector<8x128xf32>, vector<128x128xf32>, vector<8x128xf32> -> vector<8x128xf32>
    %110 = vector.extract_strided_slice %109 {offsets = [0, 0], sizes = [8, 1], strides = [1, 1]} : vector<8x128xf32> to vector<8x1xf32>
    %cst_44 = arith.constant 1.000000e+01 : f32
    %111 = vector.broadcast %cst_44 : f32 to vector<8x1xf32>
    %112 = arith.subf %111, %100 : vector<8x1xf32>
    %113 = arith.minimumf %110, %112 : vector<8x1xf32>
    %cst_45 = arith.constant 2.000000e-01 : f32
    %114 = vector.broadcast %cst_45 : f32 to vector<8x1xf32>
    %115 = arith.subf %104, %114 : vector<8x1xf32>
    %cst_46 = arith.constant 0.000000e+00 : f32
    %116 = vector.broadcast %cst_46 : f32 to vector<8x1xf32>
    %117 = arith.maximumf %115, %116 : vector<8x1xf32>
    %cst_47 = arith.constant 2.000000e-01 : f32
    %118 = vector.broadcast %cst_47 : f32 to vector<8x1xf32>
    %119 = arith.subf %104, %118 : vector<8x1xf32>
    %120 = arith.mulf %117, %119 : vector<8x1xf32>
    %cst_48 = arith.constant 6.400000e+01 : f32
    %121 = vector.broadcast %cst_48 : f32 to vector<8x1xf32>
    %122 = arith.mulf %120, %121 : vector<8x1xf32>
    %cst_49 = arith.constant 0.000000e+00 : f32
    %123 = vector.broadcast %cst_49 : f32 to vector<8x1xf32>
    %124 = arith.cmpf ogt, %113, %123 : vector<8x1xf32>
    %125 = arith.subf %122, %98 : vector<8x1xf32>
    %126 = math.exp %125 : vector<8x1xf32>
    %127 = arith.mulf %113, %126 : vector<8x1xf32>
    %cst_50 = arith.constant 0.000000e+00 : f32
    %128 = vector.broadcast %cst_50 : f32 to vector<8x1xf32>
    %129 = arith.select %124, %127, %128 : vector<8x1xi1>, vector<8x1xf32>
    %130 = arith.addf %99, %129 : vector<8x1xf32>
    %131 = arith.addf %100, %113 : vector<8x1xf32>
    %cst_51 = arith.constant 0xFF800000 : f32
    %132 = vector.broadcast %cst_51 : f32 to vector<8x128xf32>
    %133 = arith.select %106, %132, %102 : vector<8x128xi1>, vector<8x128xf32>
    %cst_52 = arith.constant dense<0xFF800000> : vector<8xf32>
    %134 = vector.multi_reduction <maximumf>, %133, %cst_52 [1] : vector<8x128xf32> to vector<8xf32>
    %135 = vector.shape_cast %134 : vector<8xf32> to vector<8x1xf32>
    %136 = vector.broadcast %135 : vector<8x1xf32> to vector<8x128xf32>
    %137 = arith.cmpf oeq, %133, %136 : vector<8x128xf32>
    %138 = arith.extui %137 : vector<8x128xi1> to vector<8x128xi32>
    %139 = arith.sitofp %138 : vector<8x128xi32> to vector<8x128xf32>
    %cst_53 = arith.constant dense<0.000000e+00> : vector<8x128xf32>
    %140 = tpu.matmul %139, %2, %cst_53 {dimension_numbers = #tpu.dot_dimension_numbers<[1], [0], [0], [1], [0, 0, 1, 1], [], []>} : vector<8x128xf32>, vector<128x128xf32>, vector<8x128xf32> -> vector<8x128xf32>
    %141 = vector.extract_strided_slice %140 {offsets = [0, 0], sizes = [8, 1], strides = [1, 1]} : vector<8x128xf32> to vector<8x1xf32>
    %cst_54 = arith.constant 1.000000e+01 : f32
    %142 = vector.broadcast %cst_54 : f32 to vector<8x1xf32>
    %143 = arith.subf %142, %131 : vector<8x1xf32>
    %144 = arith.minimumf %141, %143 : vector<8x1xf32>
    %cst_55 = arith.constant 2.000000e-01 : f32
    %145 = vector.broadcast %cst_55 : f32 to vector<8x1xf32>
    %146 = arith.subf %135, %145 : vector<8x1xf32>
    %cst_56 = arith.constant 0.000000e+00 : f32
    %147 = vector.broadcast %cst_56 : f32 to vector<8x1xf32>
    %148 = arith.maximumf %146, %147 : vector<8x1xf32>
    %cst_57 = arith.constant 2.000000e-01 : f32
    %149 = vector.broadcast %cst_57 : f32 to vector<8x1xf32>
    %150 = arith.subf %135, %149 : vector<8x1xf32>
    %151 = arith.mulf %148, %150 : vector<8x1xf32>
    %cst_58 = arith.constant 6.400000e+01 : f32
    %152 = vector.broadcast %cst_58 : f32 to vector<8x1xf32>
    %153 = arith.mulf %151, %152 : vector<8x1xf32>
    %cst_59 = arith.constant 0.000000e+00 : f32
    %154 = vector.broadcast %cst_59 : f32 to vector<8x1xf32>
    %155 = arith.cmpf ogt, %144, %154 : vector<8x1xf32>
    %156 = arith.subf %153, %98 : vector<8x1xf32>
    %157 = math.exp %156 : vector<8x1xf32>
    %158 = arith.mulf %144, %157 : vector<8x1xf32>
    %cst_60 = arith.constant 0.000000e+00 : f32
    %159 = vector.broadcast %cst_60 : f32 to vector<8x1xf32>
    %160 = arith.select %155, %158, %159 : vector<8x1xi1>, vector<8x1xf32>
    %161 = arith.addf %130, %160 : vector<8x1xf32>
    %162 = arith.addf %131, %144 : vector<8x1xf32>
    %cst_61 = arith.constant 0xFF800000 : f32
    %163 = vector.broadcast %cst_61 : f32 to vector<8x128xf32>
    %164 = arith.select %137, %163, %133 : vector<8x128xi1>, vector<8x128xf32>
    %cst_62 = arith.constant dense<0xFF800000> : vector<8xf32>
    %165 = vector.multi_reduction <maximumf>, %164, %cst_62 [1] : vector<8x128xf32> to vector<8xf32>
    %166 = vector.shape_cast %165 : vector<8xf32> to vector<8x1xf32>
    %167 = vector.broadcast %166 : vector<8x1xf32> to vector<8x128xf32>
    %168 = arith.cmpf oeq, %164, %167 : vector<8x128xf32>
    %169 = arith.extui %168 : vector<8x128xi1> to vector<8x128xi32>
    %170 = arith.sitofp %169 : vector<8x128xi32> to vector<8x128xf32>
    %cst_63 = arith.constant dense<0.000000e+00> : vector<8x128xf32>
    %171 = tpu.matmul %170, %2, %cst_63 {dimension_numbers = #tpu.dot_dimension_numbers<[1], [0], [0], [1], [0, 0, 1, 1], [], []>} : vector<8x128xf32>, vector<128x128xf32>, vector<8x128xf32> -> vector<8x128xf32>
    %172 = vector.extract_strided_slice %171 {offsets = [0, 0], sizes = [8, 1], strides = [1, 1]} : vector<8x128xf32> to vector<8x1xf32>
    %cst_64 = arith.constant 1.000000e+01 : f32
    %173 = vector.broadcast %cst_64 : f32 to vector<8x1xf32>
    %174 = arith.subf %173, %162 : vector<8x1xf32>
    %175 = arith.minimumf %172, %174 : vector<8x1xf32>
    %cst_65 = arith.constant 2.000000e-01 : f32
    %176 = vector.broadcast %cst_65 : f32 to vector<8x1xf32>
    %177 = arith.subf %166, %176 : vector<8x1xf32>
    %cst_66 = arith.constant 0.000000e+00 : f32
    %178 = vector.broadcast %cst_66 : f32 to vector<8x1xf32>
    %179 = arith.maximumf %177, %178 : vector<8x1xf32>
    %cst_67 = arith.constant 2.000000e-01 : f32
    %180 = vector.broadcast %cst_67 : f32 to vector<8x1xf32>
    %181 = arith.subf %166, %180 : vector<8x1xf32>
    %182 = arith.mulf %179, %181 : vector<8x1xf32>
    %cst_68 = arith.constant 6.400000e+01 : f32
    %183 = vector.broadcast %cst_68 : f32 to vector<8x1xf32>
    %184 = arith.mulf %182, %183 : vector<8x1xf32>
    %cst_69 = arith.constant 0.000000e+00 : f32
    %185 = vector.broadcast %cst_69 : f32 to vector<8x1xf32>
    %186 = arith.cmpf ogt, %175, %185 : vector<8x1xf32>
    %187 = arith.subf %184, %98 : vector<8x1xf32>
    %188 = math.exp %187 : vector<8x1xf32>
    %189 = arith.mulf %175, %188 : vector<8x1xf32>
    %cst_70 = arith.constant 0.000000e+00 : f32
    %190 = vector.broadcast %cst_70 : f32 to vector<8x1xf32>
    %191 = arith.select %186, %189, %190 : vector<8x1xi1>, vector<8x1xf32>
    %192 = arith.addf %161, %191 : vector<8x1xf32>
    %193 = arith.addf %162, %175 : vector<8x1xf32>
    %cst_71 = arith.constant 0xFF800000 : f32
    %194 = vector.broadcast %cst_71 : f32 to vector<8x128xf32>
    %195 = arith.select %168, %194, %164 : vector<8x128xi1>, vector<8x128xf32>
    %cst_72 = arith.constant dense<0xFF800000> : vector<8xf32>
    %196 = vector.multi_reduction <maximumf>, %195, %cst_72 [1] : vector<8x128xf32> to vector<8xf32>
    %197 = vector.shape_cast %196 : vector<8xf32> to vector<8x1xf32>
    %198 = vector.broadcast %197 : vector<8x1xf32> to vector<8x128xf32>
    %199 = arith.cmpf oeq, %195, %198 : vector<8x128xf32>
    %200 = arith.extui %199 : vector<8x128xi1> to vector<8x128xi32>
    %201 = arith.sitofp %200 : vector<8x128xi32> to vector<8x128xf32>
    %cst_73 = arith.constant dense<0.000000e+00> : vector<8x128xf32>
    %202 = tpu.matmul %201, %2, %cst_73 {dimension_numbers = #tpu.dot_dimension_numbers<[1], [0], [0], [1], [0, 0, 1, 1], [], []>} : vector<8x128xf32>, vector<128x128xf32>, vector<8x128xf32> -> vector<8x128xf32>
    %203 = vector.extract_strided_slice %202 {offsets = [0, 0], sizes = [8, 1], strides = [1, 1]} : vector<8x128xf32> to vector<8x1xf32>
    %cst_74 = arith.constant 1.000000e+01 : f32
    %204 = vector.broadcast %cst_74 : f32 to vector<8x1xf32>
    %205 = arith.subf %204, %193 : vector<8x1xf32>
    %206 = arith.minimumf %203, %205 : vector<8x1xf32>
    %cst_75 = arith.constant 2.000000e-01 : f32
    %207 = vector.broadcast %cst_75 : f32 to vector<8x1xf32>
    %208 = arith.subf %197, %207 : vector<8x1xf32>
    %cst_76 = arith.constant 0.000000e+00 : f32
    %209 = vector.broadcast %cst_76 : f32 to vector<8x1xf32>
    %210 = arith.maximumf %208, %209 : vector<8x1xf32>
    %cst_77 = arith.constant 2.000000e-01 : f32
    %211 = vector.broadcast %cst_77 : f32 to vector<8x1xf32>
    %212 = arith.subf %197, %211 : vector<8x1xf32>
    %213 = arith.mulf %210, %212 : vector<8x1xf32>
    %cst_78 = arith.constant 6.400000e+01 : f32
    %214 = vector.broadcast %cst_78 : f32 to vector<8x1xf32>
    %215 = arith.mulf %213, %214 : vector<8x1xf32>
    %cst_79 = arith.constant 0.000000e+00 : f32
    %216 = vector.broadcast %cst_79 : f32 to vector<8x1xf32>
    %217 = arith.cmpf ogt, %206, %216 : vector<8x1xf32>
    %218 = arith.subf %215, %98 : vector<8x1xf32>
    %219 = math.exp %218 : vector<8x1xf32>
    %220 = arith.mulf %206, %219 : vector<8x1xf32>
    %cst_80 = arith.constant 0.000000e+00 : f32
    %221 = vector.broadcast %cst_80 : f32 to vector<8x1xf32>
    %222 = arith.select %217, %220, %221 : vector<8x1xi1>, vector<8x1xf32>
    %223 = arith.addf %192, %222 : vector<8x1xf32>
    %224 = arith.addf %193, %206 : vector<8x1xf32>
    %cst_81 = arith.constant 0xFF800000 : f32
    %225 = vector.broadcast %cst_81 : f32 to vector<8x128xf32>
    %226 = arith.select %199, %225, %195 : vector<8x128xi1>, vector<8x128xf32>
    %cst_82 = arith.constant dense<0xFF800000> : vector<8xf32>
    %227 = vector.multi_reduction <maximumf>, %226, %cst_82 [1] : vector<8x128xf32> to vector<8xf32>
    %228 = vector.shape_cast %227 : vector<8xf32> to vector<8x1xf32>
    %229 = vector.broadcast %228 : vector<8x1xf32> to vector<8x128xf32>
    %230 = arith.cmpf oeq, %226, %229 : vector<8x128xf32>
    %231 = arith.extui %230 : vector<8x128xi1> to vector<8x128xi32>
    %232 = arith.sitofp %231 : vector<8x128xi32> to vector<8x128xf32>
    %cst_83 = arith.constant dense<0.000000e+00> : vector<8x128xf32>
    %233 = tpu.matmul %232, %2, %cst_83 {dimension_numbers = #tpu.dot_dimension_numbers<[1], [0], [0], [1], [0, 0, 1, 1], [], []>} : vector<8x128xf32>, vector<128x128xf32>, vector<8x128xf32> -> vector<8x128xf32>
    %234 = vector.extract_strided_slice %233 {offsets = [0, 0], sizes = [8, 1], strides = [1, 1]} : vector<8x128xf32> to vector<8x1xf32>
    %cst_84 = arith.constant 1.000000e+01 : f32
    %235 = vector.broadcast %cst_84 : f32 to vector<8x1xf32>
    %236 = arith.subf %235, %224 : vector<8x1xf32>
    %237 = arith.minimumf %234, %236 : vector<8x1xf32>
    %cst_85 = arith.constant 2.000000e-01 : f32
    %238 = vector.broadcast %cst_85 : f32 to vector<8x1xf32>
    %239 = arith.subf %228, %238 : vector<8x1xf32>
    %cst_86 = arith.constant 0.000000e+00 : f32
    %240 = vector.broadcast %cst_86 : f32 to vector<8x1xf32>
    %241 = arith.maximumf %239, %240 : vector<8x1xf32>
    %cst_87 = arith.constant 2.000000e-01 : f32
    %242 = vector.broadcast %cst_87 : f32 to vector<8x1xf32>
    %243 = arith.subf %228, %242 : vector<8x1xf32>
    %244 = arith.mulf %241, %243 : vector<8x1xf32>
    %cst_88 = arith.constant 6.400000e+01 : f32
    %245 = vector.broadcast %cst_88 : f32 to vector<8x1xf32>
    %246 = arith.mulf %244, %245 : vector<8x1xf32>
    %cst_89 = arith.constant 0.000000e+00 : f32
    %247 = vector.broadcast %cst_89 : f32 to vector<8x1xf32>
    %248 = arith.cmpf ogt, %237, %247 : vector<8x1xf32>
    %249 = arith.subf %246, %98 : vector<8x1xf32>
    %250 = math.exp %249 : vector<8x1xf32>
    %251 = arith.mulf %237, %250 : vector<8x1xf32>
    %cst_90 = arith.constant 0.000000e+00 : f32
    %252 = vector.broadcast %cst_90 : f32 to vector<8x1xf32>
    %253 = arith.select %248, %251, %252 : vector<8x1xi1>, vector<8x1xf32>
    %254 = arith.addf %223, %253 : vector<8x1xf32>
    %255 = arith.addf %224, %237 : vector<8x1xf32>
    %cst_91 = arith.constant 0xFF800000 : f32
    %256 = vector.broadcast %cst_91 : f32 to vector<8x128xf32>
    %257 = arith.select %230, %256, %226 : vector<8x128xi1>, vector<8x128xf32>
    %cst_92 = arith.constant dense<0xFF800000> : vector<8xf32>
    %258 = vector.multi_reduction <maximumf>, %257, %cst_92 [1] : vector<8x128xf32> to vector<8xf32>
    %259 = vector.shape_cast %258 : vector<8xf32> to vector<8x1xf32>
    %260 = vector.broadcast %259 : vector<8x1xf32> to vector<8x128xf32>
    %261 = arith.cmpf oeq, %257, %260 : vector<8x128xf32>
    %262 = arith.extui %261 : vector<8x128xi1> to vector<8x128xi32>
    %263 = arith.sitofp %262 : vector<8x128xi32> to vector<8x128xf32>
    %cst_93 = arith.constant dense<0.000000e+00> : vector<8x128xf32>
    %264 = tpu.matmul %263, %2, %cst_93 {dimension_numbers = #tpu.dot_dimension_numbers<[1], [0], [0], [1], [0, 0, 1, 1], [], []>} : vector<8x128xf32>, vector<128x128xf32>, vector<8x128xf32> -> vector<8x128xf32>
    %265 = vector.extract_strided_slice %264 {offsets = [0, 0], sizes = [8, 1], strides = [1, 1]} : vector<8x128xf32> to vector<8x1xf32>
    %cst_94 = arith.constant 1.000000e+01 : f32
    %266 = vector.broadcast %cst_94 : f32 to vector<8x1xf32>
    %267 = arith.subf %266, %255 : vector<8x1xf32>
    %268 = arith.minimumf %265, %267 : vector<8x1xf32>
    %cst_95 = arith.constant 2.000000e-01 : f32
    %269 = vector.broadcast %cst_95 : f32 to vector<8x1xf32>
    %270 = arith.subf %259, %269 : vector<8x1xf32>
    %cst_96 = arith.constant 0.000000e+00 : f32
    %271 = vector.broadcast %cst_96 : f32 to vector<8x1xf32>
    %272 = arith.maximumf %270, %271 : vector<8x1xf32>
    %cst_97 = arith.constant 2.000000e-01 : f32
    %273 = vector.broadcast %cst_97 : f32 to vector<8x1xf32>
    %274 = arith.subf %259, %273 : vector<8x1xf32>
    %275 = arith.mulf %272, %274 : vector<8x1xf32>
    %cst_98 = arith.constant 6.400000e+01 : f32
    %276 = vector.broadcast %cst_98 : f32 to vector<8x1xf32>
    %277 = arith.mulf %275, %276 : vector<8x1xf32>
    %cst_99 = arith.constant 0.000000e+00 : f32
    %278 = vector.broadcast %cst_99 : f32 to vector<8x1xf32>
    %279 = arith.cmpf ogt, %268, %278 : vector<8x1xf32>
    %280 = arith.subf %277, %98 : vector<8x1xf32>
    %281 = math.exp %280 : vector<8x1xf32>
    %282 = arith.mulf %268, %281 : vector<8x1xf32>
    %cst_100 = arith.constant 0.000000e+00 : f32
    %283 = vector.broadcast %cst_100 : f32 to vector<8x1xf32>
    %284 = arith.select %279, %282, %283 : vector<8x1xi1>, vector<8x1xf32>
    %285 = arith.addf %254, %284 : vector<8x1xf32>
    %286 = arith.addf %255, %268 : vector<8x1xf32>
    %cst_101 = arith.constant 0xFF800000 : f32
    %287 = vector.broadcast %cst_101 : f32 to vector<8x128xf32>
    %288 = arith.select %261, %287, %257 : vector<8x128xi1>, vector<8x128xf32>
    %cst_102 = arith.constant dense<0xFF800000> : vector<8xf32>
    %289 = vector.multi_reduction <maximumf>, %288, %cst_102 [1] : vector<8x128xf32> to vector<8xf32>
    %290 = vector.shape_cast %289 : vector<8xf32> to vector<8x1xf32>
    %291 = vector.broadcast %290 : vector<8x1xf32> to vector<8x128xf32>
    %292 = arith.cmpf oeq, %288, %291 : vector<8x128xf32>
    %293 = arith.extui %292 : vector<8x128xi1> to vector<8x128xi32>
    %294 = arith.sitofp %293 : vector<8x128xi32> to vector<8x128xf32>
    %cst_103 = arith.constant dense<0.000000e+00> : vector<8x128xf32>
    %295 = tpu.matmul %294, %2, %cst_103 {dimension_numbers = #tpu.dot_dimension_numbers<[1], [0], [0], [1], [0, 0, 1, 1], [], []>} : vector<8x128xf32>, vector<128x128xf32>, vector<8x128xf32> -> vector<8x128xf32>
    %296 = vector.extract_strided_slice %295 {offsets = [0, 0], sizes = [8, 1], strides = [1, 1]} : vector<8x128xf32> to vector<8x1xf32>
    %cst_104 = arith.constant 1.000000e+01 : f32
    %297 = vector.broadcast %cst_104 : f32 to vector<8x1xf32>
    %298 = arith.subf %297, %286 : vector<8x1xf32>
    %299 = arith.minimumf %296, %298 : vector<8x1xf32>
    %cst_105 = arith.constant 2.000000e-01 : f32
    %300 = vector.broadcast %cst_105 : f32 to vector<8x1xf32>
    %301 = arith.subf %290, %300 : vector<8x1xf32>
    %cst_106 = arith.constant 0.000000e+00 : f32
    %302 = vector.broadcast %cst_106 : f32 to vector<8x1xf32>
    %303 = arith.maximumf %301, %302 : vector<8x1xf32>
    %cst_107 = arith.constant 2.000000e-01 : f32
    %304 = vector.broadcast %cst_107 : f32 to vector<8x1xf32>
    %305 = arith.subf %290, %304 : vector<8x1xf32>
    %306 = arith.mulf %303, %305 : vector<8x1xf32>
    %cst_108 = arith.constant 6.400000e+01 : f32
    %307 = vector.broadcast %cst_108 : f32 to vector<8x1xf32>
    %308 = arith.mulf %306, %307 : vector<8x1xf32>
    %cst_109 = arith.constant 0.000000e+00 : f32
    %309 = vector.broadcast %cst_109 : f32 to vector<8x1xf32>
    %310 = arith.cmpf ogt, %299, %309 : vector<8x1xf32>
    %311 = arith.subf %308, %98 : vector<8x1xf32>
    %312 = math.exp %311 : vector<8x1xf32>
    %313 = arith.mulf %299, %312 : vector<8x1xf32>
    %cst_110 = arith.constant 0.000000e+00 : f32
    %314 = vector.broadcast %cst_110 : f32 to vector<8x1xf32>
    %315 = arith.select %310, %313, %314 : vector<8x1xi1>, vector<8x1xf32>
    %316 = arith.addf %285, %315 : vector<8x1xf32>
    %317 = arith.addf %286, %299 : vector<8x1xf32>
    %cst_111 = arith.constant 0xFF800000 : f32
    %318 = vector.broadcast %cst_111 : f32 to vector<8x128xf32>
    %319 = arith.select %292, %318, %288 : vector<8x128xi1>, vector<8x128xf32>
    %cst_112 = arith.constant dense<0xFF800000> : vector<8xf32>
    %320 = vector.multi_reduction <maximumf>, %319, %cst_112 [1] : vector<8x128xf32> to vector<8xf32>
    %321 = vector.shape_cast %320 : vector<8xf32> to vector<8x1xf32>
    %322 = vector.broadcast %321 : vector<8x1xf32> to vector<8x128xf32>
    %323 = arith.cmpf oeq, %319, %322 : vector<8x128xf32>
    %324 = arith.extui %323 : vector<8x128xi1> to vector<8x128xi32>
    %325 = arith.sitofp %324 : vector<8x128xi32> to vector<8x128xf32>
    %cst_113 = arith.constant dense<0.000000e+00> : vector<8x128xf32>
    %326 = tpu.matmul %325, %2, %cst_113 {dimension_numbers = #tpu.dot_dimension_numbers<[1], [0], [0], [1], [0, 0, 1, 1], [], []>} : vector<8x128xf32>, vector<128x128xf32>, vector<8x128xf32> -> vector<8x128xf32>
    %327 = vector.extract_strided_slice %326 {offsets = [0, 0], sizes = [8, 1], strides = [1, 1]} : vector<8x128xf32> to vector<8x1xf32>
    %cst_114 = arith.constant 1.000000e+01 : f32
    %328 = vector.broadcast %cst_114 : f32 to vector<8x1xf32>
    %329 = arith.subf %328, %317 : vector<8x1xf32>
    %330 = arith.minimumf %327, %329 : vector<8x1xf32>
    %cst_115 = arith.constant 2.000000e-01 : f32
    %331 = vector.broadcast %cst_115 : f32 to vector<8x1xf32>
    %332 = arith.subf %321, %331 : vector<8x1xf32>
    %cst_116 = arith.constant 0.000000e+00 : f32
    %333 = vector.broadcast %cst_116 : f32 to vector<8x1xf32>
    %334 = arith.maximumf %332, %333 : vector<8x1xf32>
    %cst_117 = arith.constant 2.000000e-01 : f32
    %335 = vector.broadcast %cst_117 : f32 to vector<8x1xf32>
    %336 = arith.subf %321, %335 : vector<8x1xf32>
    %337 = arith.mulf %334, %336 : vector<8x1xf32>
    %cst_118 = arith.constant 6.400000e+01 : f32
    %338 = vector.broadcast %cst_118 : f32 to vector<8x1xf32>
    %339 = arith.mulf %337, %338 : vector<8x1xf32>
    %cst_119 = arith.constant 0.000000e+00 : f32
    %340 = vector.broadcast %cst_119 : f32 to vector<8x1xf32>
    %341 = arith.cmpf ogt, %330, %340 : vector<8x1xf32>
    %342 = arith.subf %339, %98 : vector<8x1xf32>
    %343 = math.exp %342 : vector<8x1xf32>
    %344 = arith.mulf %330, %343 : vector<8x1xf32>
    %cst_120 = arith.constant 0.000000e+00 : f32
    %345 = vector.broadcast %cst_120 : f32 to vector<8x1xf32>
    %346 = arith.select %341, %344, %345 : vector<8x1xi1>, vector<8x1xf32>
    %347 = arith.addf %316, %346 : vector<8x1xf32>
    %348 = arith.addf %317, %330 : vector<8x1xf32>
    %cst_121 = arith.constant 0xFF800000 : f32
    %349 = vector.broadcast %cst_121 : f32 to vector<8x128xf32>
    %350 = arith.select %323, %349, %319 : vector<8x128xi1>, vector<8x128xf32>
    %cst_122 = arith.constant dense<0xFF800000> : vector<8xf32>
    %351 = vector.multi_reduction <maximumf>, %350, %cst_122 [1] : vector<8x128xf32> to vector<8xf32>
    %352 = vector.shape_cast %351 : vector<8xf32> to vector<8x1xf32>
    %353 = vector.broadcast %352 : vector<8x1xf32> to vector<8x128xf32>
    %354 = arith.cmpf oeq, %350, %353 : vector<8x128xf32>
    %355 = arith.extui %354 : vector<8x128xi1> to vector<8x128xi32>
    %356 = arith.sitofp %355 : vector<8x128xi32> to vector<8x128xf32>
    %cst_123 = arith.constant dense<0.000000e+00> : vector<8x128xf32>
    %357 = tpu.matmul %356, %2, %cst_123 {dimension_numbers = #tpu.dot_dimension_numbers<[1], [0], [0], [1], [0, 0, 1, 1], [], []>} : vector<8x128xf32>, vector<128x128xf32>, vector<8x128xf32> -> vector<8x128xf32>
    %358 = vector.extract_strided_slice %357 {offsets = [0, 0], sizes = [8, 1], strides = [1, 1]} : vector<8x128xf32> to vector<8x1xf32>
    %cst_124 = arith.constant 1.000000e+01 : f32
    %359 = vector.broadcast %cst_124 : f32 to vector<8x1xf32>
    %360 = arith.subf %359, %348 : vector<8x1xf32>
    %361 = arith.minimumf %358, %360 : vector<8x1xf32>
    %cst_125 = arith.constant 2.000000e-01 : f32
    %362 = vector.broadcast %cst_125 : f32 to vector<8x1xf32>
    %363 = arith.subf %352, %362 : vector<8x1xf32>
    %cst_126 = arith.constant 0.000000e+00 : f32
    %364 = vector.broadcast %cst_126 : f32 to vector<8x1xf32>
    %365 = arith.maximumf %363, %364 : vector<8x1xf32>
    %cst_127 = arith.constant 2.000000e-01 : f32
    %366 = vector.broadcast %cst_127 : f32 to vector<8x1xf32>
    %367 = arith.subf %352, %366 : vector<8x1xf32>
    %368 = arith.mulf %365, %367 : vector<8x1xf32>
    %cst_128 = arith.constant 6.400000e+01 : f32
    %369 = vector.broadcast %cst_128 : f32 to vector<8x1xf32>
    %370 = arith.mulf %368, %369 : vector<8x1xf32>
    %cst_129 = arith.constant 0.000000e+00 : f32
    %371 = vector.broadcast %cst_129 : f32 to vector<8x1xf32>
    %372 = arith.cmpf ogt, %361, %371 : vector<8x1xf32>
    %373 = arith.subf %370, %98 : vector<8x1xf32>
    %374 = math.exp %373 : vector<8x1xf32>
    %375 = arith.mulf %361, %374 : vector<8x1xf32>
    %cst_130 = arith.constant 0.000000e+00 : f32
    %376 = vector.broadcast %cst_130 : f32 to vector<8x1xf32>
    %377 = arith.select %372, %375, %376 : vector<8x1xi1>, vector<8x1xf32>
    %378 = arith.addf %347, %377 : vector<8x1xf32>
    %379 = math.log %378 : vector<8x1xf32>
    %380 = arith.addf %98, %379 : vector<8x1xf32>
    %381 = arith.select %57, %380, %74 : vector<8x1xi1>, vector<8x1xf32>
    %382 = arith.addf %381, %38 : vector<8x1xf32>
    %cst_131 = arith.constant 0.000000e+00 : f32
    %383 = vector.broadcast %cst_131 : f32 to vector<8x1xf32>
    %384 = arith.maximumf %382, %383 : vector<8x1xf32>
    %385 = math.absf %382 : vector<8x1xf32>
    %cst_132 = arith.constant 0.000000e+00 : f32
    %386 = vector.broadcast %cst_132 : f32 to vector<8x1xf32>
    %387 = arith.subf %386, %385 : vector<8x1xf32>
    %388 = math.exp %387 : vector<8x1xf32>
    %389 = math.log1p %388 : vector<8x1xf32>
    %390 = arith.addf %384, %389 : vector<8x1xf32>
    %cst_133 = arith.constant dense<0.000000e+00> : vector<1xf32>
    %391 = vector.multi_reduction <add>, %390, %cst_133 [0] : vector<8x1xf32> to vector<1xf32>
    %392 = vector.shape_cast %391 : vector<1xf32> to vector<1x1xf32>
    %393 = vector.shape_cast %392 : vector<1x1xf32> to vector<1x1xf32>
    %394 = vector.broadcast %393 : vector<1x1xf32> to vector<8x128xf32>
    %c0_134 = arith.constant 0 : index
    %c0_135 = arith.constant 0 : index
    %395 = vector.load %arg3[%c0_134, %c0_135] : memref<8x128xf32, #tpu.memory_space<vmem>>, vector<8x128xf32>
    tpu.vector_store %arg3[%c0_134, %c0_135], %394 {strides = array<i32>} : memref<8x128xf32, #tpu.memory_space<vmem>>, vector<8x128xf32>,
    return
  }
  func.func @transform_0(%arg0: i32) -> (i32, i32) {
    %c0_i32 = arith.constant 0 : i32
    %c0_i32_0 = arith.constant 0 : i32
    return %arg0, %c0_i32 : i32, i32
  }
  func.func @transform_1(%arg0: i32) -> (i32, i32) {
    %c0_i32 = arith.constant 0 : i32
    %c0_i32_0 = arith.constant 0 : i32
    return %arg0, %c0_i32 : i32, i32
  }
  func.func @transform_2(%arg0: i32) -> (i32, i32) {
    %c0_i32 = arith.constant 0 : i32
    %c0_i32_0 = arith.constant 0 : i32
    return %arg0, %c0_i32 : i32, i32
  }
}

</mosaic_0001>

<llo_original>
// kernel: tpu_custom_call.1
$region0: #{tpu_custom_call.1}
  #allocation0 [shape = 'u32[]', space=smem, size = 0x4, offset = 0x4, fixed_abs, tag = 'smem constant byte address 0x4 - core index']
  #allocation1 [shape = 'u32[144,128]{1,0:T(1,128)}', space=vmem, size = 0x12000, scoped, tag = 'internal scratch']
  %s0 = inlined_call_operand.hbm [shape: f32[8,128], index: 0, kind: input, shape index: {}]
  %s1 = inlined_call_operand.hbm [shape: f32[8,128], index: 1, kind: input, shape index: {}]
  %s2 = inlined_call_operand.hbm [shape: f32[8,128], index: 2, kind: output, shape index: {}]
  %s3 = sld [smem:[#allocation0]]
  $region26: #{tpu_custom_call.1} parent=0
    _
  %s5 = ssub.s32 1, %s3
  %s6 = scalar_select 0, %s5, %s3
  $region1: #{tpu_custom_call.1} parent=0
    #allocation2 [shape = 'u8[4096]{0}', space=vmem, size = 0x1000, scoped, tag = 'input window, operand 0, single buffered']
    #allocation3 [shape = 's32[1]{0}', space=sflag, size = 0x4, scoped, tag = 'scoped memory for tpu_custom_call.1']
    #allocation4 [shape = 's32[1]{0}', space=sflag, size = 0x4, scoped, tag = 'scoped memory for tpu_custom_call.1']
    #allocation5 [shape = 'u8[4096]{0}', space=vmem, size = 0x1000, scoped, tag = 'input window, operand 1, single buffered']
    #allocation6 [shape = 's32[1]{0}', space=sflag, size = 0x4, scoped, tag = 'scoped memory for tpu_custom_call.1']
    #allocation7 [shape = 'u8[4096]{0}', space=vmem, size = 0x1000, scoped, tag = 'output window, operand 0, single buffered']
    %7 = vsyncpa [#allocation3], 0
    %8 = vsyncpa [#allocation6], 0
    %9 = vsyncpa [#allocation4], 0
    // Predicated region
    $region2: #{tpu_custom_call.1} parent=1 // pred_check
      _
    $region3: #{tpu_custom_call.1} parent=1 // pred_check_branch
      %11 = sbr.rel (0) target = $region5
    $region4: #{tpu_custom_call.1} parent=1 // pred_region
      %s13 = ssub.s32 128, 128
      %14 = vsyncadd [#allocation3], %s13
      %s16 = sshll.u32 [#allocation2], 4
      %s17 = int_to_ptr.vmem [resolvable:$true] %s16
      %19 = dma.hbm_to_vmem [thread:$0]  %s0, 128, %s17, [#allocation3]
    $region5: #{tpu_custom_call.1} parent=1 // pred_fallthru
      _
    // Predicated region
    $region6: #{tpu_custom_call.1} parent=1 // pred_check
      _
    $region7: #{tpu_custom_call.1} parent=1 // pred_check_branch
      %21 = sbr.rel (0) target = $region9
    $region8: #{tpu_custom_call.1} parent=1 // pred_region
      %s23 = ssub.s32 128, 128
      %24 = vsyncadd [#allocation6], %s23
      %s26 = sshll.u32 [#allocation5], 4
      %s27 = int_to_ptr.vmem [resolvable:$true] %s26
      %29 = dma.hbm_to_vmem [thread:$0]  %s1, 128, %s27, [#allocation6]
    $region9: #{tpu_custom_call.1} parent=1 // pred_fallthru
      _
    // Predicated region
    $region10: #{tpu_custom_call.1} parent=1 // pred_check
      _
    $region11: #{tpu_custom_call.1} parent=1 // pred_check_branch
      %31 = sbr.rel (0) target = $region13
    $region12: #{tpu_custom_call.1} parent=1 // pred_region
      %32 = dma.done [#allocation3], 128
    $region13: #{tpu_custom_call.1} parent=1 // pred_fallthru
      _
    // Predicated region
    $region14: #{tpu_custom_call.1} parent=1 // pred_check
      _
    $region15: #{tpu_custom_call.1} parent=1 // pred_check_branch
      %34 = sbr.rel (0) target = $region17
    $region16: #{tpu_custom_call.1} parent=1 // pred_region
      %35 = dma.done [#allocation6], 128
    $region17: #{tpu_custom_call.1} parent=1 // pred_fallthru
      _
    %v36 = vld [vmem:[#allocation2] sm:$0xff]
    %v37 = vld [vmem:[#allocation5] sm:$0xff]
    %vm38 = vcmp.gt.f32.partialorder %v37, 0.5
    %v39 = vsub.f32 0.8, %v36
    %v40 = vmax.f32 %v39, 0.0
    %v41 = vsub.f32 0.0, %v40
    %v42 = vsub.f32 %v36, 0.8
    %v43 = vmul.f32 %v41, %v42
    %v44 = vmul.f32 %v43, 64.0
    %v45 = vsel %vm38, 1, 0
    %v46 = vcvt.s32.f32 %v45
    %47 = vmatprep.subr.mxu0 0.0
    %48 = vmatpush1.msra.mxu0 1.0
    %49 = vmatprep.subr.mxu0 0.0
    %50 = vmatpush1.msra.mxu0 1.0
    %51 = vmatprep.subr.mxu0 0.0
    %52 = vmatpush1.msra.mxu0 1.0
    %53 = vmatprep.subr.mxu0 0.0
    %54 = vmatpush1.msra.mxu0 1.0
    %55 = vmatprep.subr.mxu0 0.0
    %56 = vmatpush1.msra.mxu0 1.0
    %57 = vmatprep.subr.mxu0 0.0
    %58 = vmatpush1.msra.mxu0 1.0
    %59 = vmatprep.subr.mxu0 0.0
    %60 = vmatpush1.msra.mxu0 1.0
    %61 = vmatprep.subr.mxu0 0.0
    %62 = vmatpush1.msra.mxu0 1.0
    %63 = vmatprep.subr.mxu0 0.0
    %64 = vmatpush1.msra.mxu0 1.0
    %65 = vmatprep.subr.mxu0 0.0
    %66 = vmatpush1.msra.mxu0 1.0
    %67 = vmatprep.subr.mxu0 0.0
    %68 = vmatpush1.msra.mxu0 1.0
    %69 = vmatprep.subr.mxu0 0.0
    %70 = vmatpush1.msra.mxu0 1.0
    %71 = vmatprep.subr.mxu0 0.0
    %72 = vmatpush1.msra.mxu0 1.0
    %73 = vmatprep.subr.mxu0 0.0
    %74 = vmatpush1.msra.mxu0 1.0
    %75 = vmatprep.subr.mxu0 0.0
    %76 = vmatpush1.msra.mxu0 1.0
    %77 = vmatprep.subr.mxu0 0.0
    %78 = vmatpush1.msra.mxu0 1.0
    %79 = vmatprep.subr.mxu0 0.0
    %80 = vmatpush1.msra.mxu0 0.0
    %81 = vmatprep.subr.mxu0 0.0
    %82 = vmatpush1.msra.mxu0 0.0
    %83 = vmatprep.subr.mxu0 0.0
    %84 = vmatpush1.msra.mxu0 0.0
    %85 = vmatprep.subr.mxu0 0.0
    %86 = vmatpush1.msra.mxu0 0.0
    %87 = vmatprep.subr.mxu0 0.0
    %88 = vmatpush1.msra.mxu0 0.0
    %89 = vmatprep.subr.mxu0 0.0
    %90 = vmatpush1.msra.mxu0 0.0
    %91 = vmatprep.subr.mxu0 0.0
    %92 = vmatpush1.msra.mxu0 0.0
    %93 = vmatprep.subr.mxu0 0.0
    %94 = vmatpush1.msra.mxu0 0.0
    %95 = vmatprep.subr.mxu0 0.0
    %96 = vmatpush1.msra.mxu0 0.0
    %97 = vmatprep.subr.mxu0 0.0
    %98 = vmatpush1.msra.mxu0 0.0
    %99 = vmatprep.subr.mxu0 0.0
    %100 = vmatpush1.msra.mxu0 0.0
    %101 = vmatprep.subr.mxu0 0.0
    %102 = vmatpush1.msra.mxu0 0.0
    %103 = vmatprep.subr.mxu0 0.0
    %104 = vmatpush1.msra.mxu0 0.0
    %105 = vmatprep.subr.mxu0 0.0
    %106 = vmatpush1.msra.mxu0 0.0
    %107 = vmatprep.subr.mxu0 0.0
    %108 = vmatpush1.msra.mxu0 0.0
    %109 = vmatprep.subr.mxu0 0.0
    %110 = vmatpush1.msra.mxu0 0.0
    %111 = vmatprep.mubr.f32.mxu0 0.0
    %112 = vmatmul.mubr.f32.gmra.mrb[0].mxu0 %v46
    %v113 = vpop.f32.mrb[0].mxu0
    %v114 = vadd.f32 0.0, %v113
    %v115 = vpop.f32.mrb[0].mxu0
    %116 = vdwg.mxu0
    %vm117 = vcmp.gt.f32.partialorder %v114, 0.0
    %v118 = vsel %vm38, %v44, -inf
    %119 = vmax.xlane.f32.xlu0 %v118
    %v120 = vpop.xlane.xlu0 %119
    %v121 = vsel %vm117, %v120, 0.0
    %123 = vset.pattern.permute.xlu0 0
    %124 = vperm.xlu0 %123, %v121
    %v125 = vpop.permute.xlu0 %124
    %v127 = vsub.f32 %v44, %v125
    %v128 = vmul.f32 %v127, 1.442695
    %v129 = vpow.pop %v128
    %v130 = vsel %vm38, %v129, 0.0
    %131 = vmatprep.subr.mxu0 0.0
    %132 = vmatpush1.msra.mxu0 1.0
    %133 = vmatprep.subr.mxu0 0.0
    %134 = vmatpush1.msra.mxu0 1.0
    %135 = vmatprep.subr.mxu0 0.0
    %136 = vmatpush1.msra.mxu0 1.0
    %137 = vmatprep.subr.mxu0 0.0
    %138 = vmatpush1.msra.mxu0 1.0
    %139 = vmatprep.subr.mxu0 0.0
    %140 = vmatpush1.msra.mxu0 1.0
    %141 = vmatprep.subr.mxu0 0.0
    %142 = vmatpush1.msra.mxu0 1.0
    %143 = vmatprep.subr.mxu0 0.0
    %144 = vmatpush1.msra.mxu0 1.0
    %145 = vmatprep.subr.mxu0 0.0
    %146 = vmatpush1.msra.mxu0 1.0
    %147 = vmatprep.subr.mxu0 0.0
    %148 = vmatpush1.msra.mxu0 1.0
    %149 = vmatprep.subr.mxu0 0.0
    %150 = vmatpush1.msra.mxu0 1.0
    %151 = vmatprep.subr.mxu0 0.0
    %152 = vmatpush1.msra.mxu0 1.0
    %153 = vmatprep.subr.mxu0 0.0
    %154 = vmatpush1.msra.mxu0 1.0
    %155 = vmatprep.subr.mxu0 0.0
    %156 = vmatpush1.msra.mxu0 1.0
    %157 = vmatprep.subr.mxu0 0.0
    %158 = vmatpush1.msra.mxu0 1.0
    %159 = vmatprep.subr.mxu0 0.0
    %160 = vmatpush1.msra.mxu0 1.0
    %161 = vmatprep.subr.mxu0 0.0
    %162 = vmatpush1.msra.mxu0 1.0
    %163 = vmatprep.subr.mxu0 0.0
    %164 = vmatpush1.msra.mxu0 0.0
    %165 = vmatprep.subr.mxu0 0.0
    %166 = vmatpush1.msra.mxu0 0.0
    %167 = vmatprep.subr.mxu0 0.0
    %168 = vmatpush1.msra.mxu0 0.0
    %169 = vmatprep.subr.mxu0 0.0
    %170 = vmatpush1.msra.mxu0 0.0
    %171 = vmatprep.subr.mxu0 0.0
    %172 = vmatpush1.msra.mxu0 0.0
    %173 = vmatprep.subr.mxu0 0.0
    %174 = vmatpush1.msra.mxu0 0.0
    %175 = vmatprep.subr.mxu0 0.0
    %176 = vmatpush1.msra.mxu0 0.0
    %177 = vmatprep.subr.mxu0 0.0
    %178 = vmatpush1.msra.mxu0 0.0
    %179 = vmatprep.subr.mxu0 0.0
    %180 = vmatpush1.msra.mxu0 0.0
    %181 = vmatprep.subr.mxu0 0.0
    %182 = vmatpush1.msra.mxu0 0.0
    %183 = vmatprep.subr.mxu0 0.0
    %184 = vmatpush1.msra.mxu0 0.0
    %185 = vmatprep.subr.mxu0 0.0
    %186 = vmatpush1.msra.mxu0 0.0
    %187 = vmatprep.subr.mxu0 0.0
    %188 = vmatpush1.msra.mxu0 0.0
    %189 = vmatprep.subr.mxu0 0.0
    %190 = vmatpush1.msra.mxu0 0.0
    %191 = vmatprep.subr.mxu0 0.0
    %192 = vmatpush1.msra.mxu0 0.0
    %193 = vmatprep.subr.mxu0 0.0
    %194 = vmatpush1.msra.mxu0 0.0
    %195 = vmatprep.mubr.f32.mxu0 0.0
    %196 = vmatmul.mubr.f32.gmra.mrb[0].mxu0 %v130
    %v197 = vpop.f32.mrb[0].mxu0
    %v198 = vadd.f32 0.0, %v197
    %v199 = vpop.f32.mrb[0].mxu0
    %200 = vdwg.mxu0
    %v201 = vlog2.pop %v198
    %v202 = vmul.f32 %v201, 0.6931472
    %v203 = vadd.f32 %v121, %v202
    %v204 = vsel %vm117, %v203, 0.0
    %vm205 = vcmp.lt.f32.partialorder %v37, 0.25
    %v206 = vsub.f32 %v36, 0.2
    %v207 = vmax.f32 %v206, 0.0
    %v208 = vmul.f32 %v207, %v206
    %v209 = vmul.f32 %v208, 64.0
    %v210 = vsel %vm205, 1, 0
    %v211 = vcvt.s32.f32 %v210
    %212 = vmatprep.subr.mxu0 0.0
    %213 = vmatpush1.msra.mxu0 1.0
    %214 = vmatprep.subr.mxu0 0.0
    %215 = vmatpush1.msra.mxu0 1.0
    %216 = vmatprep.subr.mxu0 0.0
    %217 = vmatpush1.msra.mxu0 1.0
    %218 = vmatprep.subr.mxu0 0.0
    %219 = vmatpush1.msra.mxu0 1.0
    %220 = vmatprep.subr.mxu0 0.0
    %221 = vmatpush1.msra.mxu0 1.0
    %222 = vmatprep.subr.mxu0 0.0
    %223 = vmatpush1.msra.mxu0 1.0
    %224 = vmatprep.subr.mxu0 0.0
    %225 = vmatpush1.msra.mxu0 1.0
    %226 = vmatprep.subr.mxu0 0.0
    %227 = vmatpush1.msra.mxu0 1.0
    %228 = vmatprep.subr.mxu0 0.0
    %229 = vmatpush1.msra.mxu0 1.0
    %230 = vmatprep.subr.mxu0 0.0
    %231 = vmatpush1.msra.mxu0 1.0
    %232 = vmatprep.subr.mxu0 0.0
    %233 = vmatpush1.msra.mxu0 1.0
    %234 = vmatprep.subr.mxu0 0.0
    %235 = vmatpush1.msra.mxu0 1.0
    %236 = vmatprep.subr.mxu0 0.0
    %237 = vmatpush1.msra.mxu0 1.0
    %238 = vmatprep.subr.mxu0 0.0
    %239 = vmatpush1.msra.mxu0 1.0
    %240 = vmatprep.subr.mxu0 0.0
    %241 = vmatpush1.msra.mxu0 1.0
    %242 = vmatprep.subr.mxu0 0.0
    %243 = vmatpush1.msra.mxu0 1.0
    %244 = vmatprep.subr.mxu0 0.0
    %245 = vmatpush1.msra.mxu0 0.0
    %246 = vmatprep.subr.mxu0 0.0
    %247 = vmatpush1.msra.mxu0 0.0
    %248 = vmatprep.subr.mxu0 0.0
    %249 = vmatpush1.msra.mxu0 0.0
    %250 = vmatprep.subr.mxu0 0.0
    %251 = vmatpush1.msra.mxu0 0.0
    %252 = vmatprep.subr.mxu0 0.0
    %253 = vmatpush1.msra.mxu0 0.0
    %254 = vmatprep.subr.mxu0 0.0
    %255 = vmatpush1.msra.mxu0 0.0
    %256 = vmatprep.subr.mxu0 0.0
    %257 = vmatpush1.msra.mxu0 0.0
    %258 = vmatprep.subr.mxu0 0.0
    %259 = vmatpush1.msra.mxu0 0.0
    %260 = vmatprep.subr.mxu0 0.0
    %261 = vmatpush1.msra.mxu0 0.0
    %262 = vmatprep.subr.mxu0 0.0
    %263 = vmatpush1.msra.mxu0 0.0
    %264 = vmatprep.subr.mxu0 0.0
    %265 = vmatpush1.msra.mxu0 0.0
    %266 = vmatprep.subr.mxu0 0.0
    %267 = vmatpush1.msra.mxu0 0.0
    %268 = vmatprep.subr.mxu0 0.0
    %269 = vmatpush1.msra.mxu0 0.0
    %270 = vmatprep.subr.mxu0 0.0
    %271 = vmatpush1.msra.mxu0 0.0
    %272 = vmatprep.subr.mxu0 0.0
    %273 = vmatpush1.msra.mxu0 0.0
    %274 = vmatprep.subr.mxu0 0.0
    %275 = vmatpush1.msra.mxu0 0.0
    %276 = vmatprep.mubr.f32.mxu0 0.0
    %277 = vmatmul.mubr.f32.gmra.mrb[0].mxu0 %v211
    %v278 = vpop.f32.mrb[0].mxu0
    %v279 = vadd.f32 0.0, %v278
    %v280 = vpop.f32.mrb[0].mxu0
    %281 = vdwg.mxu0
    %vm282 = vcmp.gt.f32.partialorder %v279, 0.0
    %vm283 = vcmp.gt.f32.partialorder %v279, 20.0
    %v284 = vsel %vm205, %v209, -inf
    %285 = vmax.xlane.f32.xlu0 %v284
    %v286 = vpop.xlane.xlu0 %285
    %v287 = vsel %vm282, %v286, 0.0
    %289 = vset.pattern.permute.xlu0 0
    %290 = vperm.xlu0 %289, %v287
    %v291 = vpop.permute.xlu0 %290
    %v293 = vsub.f32 %v209, %v291
    %v294 = vmul.f32 %v293, 1.442695
    %v295 = vpow.pop %v294
    %v296 = vsel %vm205, %v295, 0.0
    %297 = vmatprep.subr.mxu0 0.0
    %298 = vmatpush1.msra.mxu0 1.0
    %299 = vmatprep.subr.mxu0 0.0
    %300 = vmatpush1.msra.mxu0 1.0
    %301 = vmatprep.subr.mxu0 0.0
    %302 = vmatpush1.msra.mxu0 1.0
    %303 = vmatprep.subr.mxu0 0.0
    %304 = vmatpush1.msra.mxu0 1.0
    %305 = vmatprep.subr.mxu0 0.0
    %306 = vmatpush1.msra.mxu0 1.0
    %307 = vmatprep.subr.mxu0 0.0
    %308 = vmatpush1.msra.mxu0 1.0
    %309 = vmatprep.subr.mxu0 0.0
    %310 = vmatpush1.msra.mxu0 1.0
    %311 = vmatprep.subr.mxu0 0.0
    %312 = vmatpush1.msra.mxu0 1.0
    %313 = vmatprep.subr.mxu0 0.0
    %314 = vmatpush1.msra.mxu0 1.0
    %315 = vmatprep.subr.mxu0 0.0
    %316 = vmatpush1.msra.mxu0 1.0
    %317 = vmatprep.subr.mxu0 0.0
    %318 = vmatpush1.msra.mxu0 1.0
    %319 = vmatprep.subr.mxu0 0.0
    %320 = vmatpush1.msra.mxu0 1.0
    %321 = vmatprep.subr.mxu0 0.0
    %322 = vmatpush1.msra.mxu0 1.0
    %323 = vmatprep.subr.mxu0 0.0
    %324 = vmatpush1.msra.mxu0 1.0
    %325 = vmatprep.subr.mxu0 0.0
    %326 = vmatpush1.msra.mxu0 1.0
    %327 = vmatprep.subr.mxu0 0.0
    %328 = vmatpush1.msra.mxu0 1.0
    %329 = vmatprep.subr.mxu0 0.0
    %330 = vmatpush1.msra.mxu0 0.0
    %331 = vmatprep.subr.mxu0 0.0
    %332 = vmatpush1.msra.mxu0 0.0
    %333 = vmatprep.subr.mxu0 0.0
    %334 = vmatpush1.msra.mxu0 0.0
    %335 = vmatprep.subr.mxu0 0.0
    %336 = vmatpush1.msra.mxu0 0.0
    %337 = vmatprep.subr.mxu0 0.0
    %338 = vmatpush1.msra.mxu0 0.0
    %339 = vmatprep.subr.mxu0 0.0
    %340 = vmatpush1.msra.mxu0 0.0
    %341 = vmatprep.subr.mxu0 0.0
    %342 = vmatpush1.msra.mxu0 0.0
    %343 = vmatprep.subr.mxu0 0.0
    %344 = vmatpush1.msra.mxu0 0.0
    %345 = vmatprep.subr.mxu0 0.0
    %346 = vmatpush1.msra.mxu0 0.0
    %347 = vmatprep.subr.mxu0 0.0
    %348 = vmatpush1.msra.mxu0 0.0
    %349 = vmatprep.subr.mxu0 0.0
    %350 = vmatpush1.msra.mxu0 0.0
    %351 = vmatprep.subr.mxu0 0.0
    %352 = vmatpush1.msra.mxu0 0.0
    %353 = vmatprep.subr.mxu0 0.0
    %354 = vmatpush1.msra.mxu0 0.0
    %355 = vmatprep.subr.mxu0 0.0
    %356 = vmatpush1.msra.mxu0 0.0
    %357 = vmatprep.subr.mxu0 0.0
    %358 = vmatpush1.msra.mxu0 0.0
    %359 = vmatprep.subr.mxu0 0.0
    %360 = vmatpush1.msra.mxu0 0.0
    %361 = vmatprep.mubr.f32.mxu0 0.0
    %362 = vmatmul.mubr.f32.gmra.mrb[0].mxu0 %v296
    %v363 = vpop.f32.mrb[0].mxu0
    %v364 = vadd.f32 0.0, %v363
    %v365 = vpop.f32.mrb[0].mxu0
    %366 = vdwg.mxu0
    %v367 = vlog2.pop %v364
    %v368 = vmul.f32 %v367, 0.6931472
    %v369 = vadd.f32 %v287, %v368
    %v370 = vsel %vm282, %v369, -inf
    %v371 = vsel %vm205, %v36, -inf
    %372 = vmax.xlane.f32.xlu0 %v371
    %v373 = vpop.xlane.xlu0 %372
    %vm374 = vcmp.eq.f32.partialorder %v371, %v373
    %v375 = vsel %vm374, 1, 0
    %v376 = vcvt.s32.f32 %v375
    %377 = vmatprep.subr.mxu0 0.0
    %378 = vmatpush1.msra.mxu0 1.0
    %379 = vmatprep.subr.mxu0 0.0
    %380 = vmatpush1.msra.mxu0 1.0
    %381 = vmatprep.subr.mxu0 0.0
    %382 = vmatpush1.msra.mxu0 1.0
    %383 = vmatprep.subr.mxu0 0.0
    %384 = vmatpush1.msra.mxu0 1.0
    %385 = vmatprep.subr.mxu0 0.0
    %386 = vmatpush1.msra.mxu0 1.0
    %387 = vmatprep.subr.mxu0 0.0
    %388 = vmatpush1.msra.mxu0 1.0
    %389 = vmatprep.subr.mxu0 0.0
    %390 = vmatpush1.msra.mxu0 1.0
    %391 = vmatprep.subr.mxu0 0.0
    %392 = vmatpush1.msra.mxu0 1.0
    %393 = vmatprep.subr.mxu0 0.0
    %394 = vmatpush1.msra.mxu0 1.0
    %395 = vmatprep.subr.mxu0 0.0
    %396 = vmatpush1.msra.mxu0 1.0
    %397 = vmatprep.subr.mxu0 0.0
    %398 = vmatpush1.msra.mxu0 1.0
    %399 = vmatprep.subr.mxu0 0.0
    %400 = vmatpush1.msra.mxu0 1.0
    %401 = vmatprep.subr.mxu0 0.0
    %402 = vmatpush1.msra.mxu0 1.0
    %403 = vmatprep.subr.mxu0 0.0
    %404 = vmatpush1.msra.mxu0 1.0
    %405 = vmatprep.subr.mxu0 0.0
    %406 = vmatpush1.msra.mxu0 1.0
    %407 = vmatprep.subr.mxu0 0.0
    %408 = vmatpush1.msra.mxu0 1.0
    %409 = vmatprep.subr.mxu0 0.0
    %410 = vmatpush1.msra.mxu0 0.0
    %411 = vmatprep.subr.mxu0 0.0
    %412 = vmatpush1.msra.mxu0 0.0
    %413 = vmatprep.subr.mxu0 0.0
    %414 = vmatpush1.msra.mxu0 0.0
    %415 = vmatprep.subr.mxu0 0.0
    %416 = vmatpush1.msra.mxu0 0.0
    %417 = vmatprep.subr.mxu0 0.0
    %418 = vmatpush1.msra.mxu0 0.0
    %419 = vmatprep.subr.mxu0 0.0
    %420 = vmatpush1.msra.mxu0 0.0
    %421 = vmatprep.subr.mxu0 0.0
    %422 = vmatpush1.msra.mxu0 0.0
    %423 = vmatprep.subr.mxu0 0.0
    %424 = vmatpush1.msra.mxu0 0.0
    %425 = vmatprep.subr.mxu0 0.0
    %426 = vmatpush1.msra.mxu0 0.0
    %427 = vmatprep.subr.mxu0 0.0
    %428 = vmatpush1.msra.mxu0 0.0
    %429 = vmatprep.subr.mxu0 0.0
    %430 = vmatpush1.msra.mxu0 0.0
    %431 = vmatprep.subr.mxu0 0.0
    %432 = vmatpush1.msra.mxu0 0.0
    %433 = vmatprep.subr.mxu0 0.0
    %434 = vmatpush1.msra.mxu0 0.0
    %435 = vmatprep.subr.mxu0 0.0
    %436 = vmatpush1.msra.mxu0 0.0
    %437 = vmatprep.subr.mxu0 0.0
    %438 = vmatpush1.msra.mxu0 0.0
    %439 = vmatprep.subr.mxu0 0.0
    %440 = vmatpush1.msra.mxu0 0.0
    %441 = vmatprep.mubr.f32.mxu0 0.0
    %442 = vmatmul.mubr.f32.gmra.mrb[0].mxu0 %v376
    %v443 = vpop.f32.mrb[0].mxu0
    %v444 = vadd.f32 0.0, %v443
    %v445 = vpop.f32.mrb[0].mxu0
    %446 = vdwg.mxu0
    %v447 = vmin.f32 %v444, 10.0
    %v448 = vsub.f32 %v373, 0.2
    %v449 = vmax.f32 %v448, 0.0
    %v450 = vmul.f32 %v449, %v448
    %v451 = vmul.f32 %v450, 64.0
    %v452 = vadd.f32 %v447, 0.0
    %v453 = vsel %vm374, -inf, %v371
    %454 = vmax.xlane.f32.xlu0 %v453
    %v455 = vpop.xlane.xlu0 %454
    %vm456 = vcmp.eq.f32.partialorder %v453, %v455
    %v457 = vsel %vm456, 1, 0
    %v458 = vcvt.s32.f32 %v457
    %459 = vmatprep.subr.mxu0 0.0
    %460 = vmatpush1.msra.mxu0 1.0
    %461 = vmatprep.subr.mxu0 0.0
    %462 = vmatpush1.msra.mxu0 1.0
    %463 = vmatprep.subr.mxu0 0.0
    %464 = vmatpush1.msra.mxu0 1.0
    %465 = vmatprep.subr.mxu0 0.0
    %466 = vmatpush1.msra.mxu0 1.0
    %467 = vmatprep.subr.mxu0 0.0
    %468 = vmatpush1.msra.mxu0 1.0
    %469 = vmatprep.subr.mxu0 0.0
    %470 = vmatpush1.msra.mxu0 1.0
    %471 = vmatprep.subr.mxu0 0.0
    %472 = vmatpush1.msra.mxu0 1.0
    %473 = vmatprep.subr.mxu0 0.0
    %474 = vmatpush1.msra.mxu0 1.0
    %475 = vmatprep.subr.mxu0 0.0
    %476 = vmatpush1.msra.mxu0 1.0
    %477 = vmatprep.subr.mxu0 0.0
    %478 = vmatpush1.msra.mxu0 1.0
    %479 = vmatprep.subr.mxu0 0.0
    %480 = vmatpush1.msra.mxu0 1.0
    %481 = vmatprep.subr.mxu0 0.0
    %482 = vmatpush1.msra.mxu0 1.0
    %483 = vmatprep.subr.mxu0 0.0
    %484 = vmatpush1.msra.mxu0 1.0
    %485 = vmatprep.subr.mxu0 0.0
    %486 = vmatpush1.msra.mxu0 1.0
    %487 = vmatprep.subr.mxu0 0.0
    %488 = vmatpush1.msra.mxu0 1.0
    %489 = vmatprep.subr.mxu0 0.0
    %490 = vmatpush1.msra.mxu0 1.0
    %491 = vmatprep.subr.mxu0 0.0
    %492 = vmatpush1.msra.mxu0 0.0
    %493 = vmatprep.subr.mxu0 0.0
    %494 = vmatpush1.msra.mxu0 0.0
    %495 = vmatprep.subr.mxu0 0.0
    %496 = vmatpush1.msra.mxu0 0.0
    %497 = vmatprep.subr.mxu0 0.0
    %498 = vmatpush1.msra.mxu0 0.0
    %499 = vmatprep.subr.mxu0 0.0
    %500 = vmatpush1.msra.mxu0 0.0
    %501 = vmatprep.subr.mxu0 0.0
    %502 = vmatpush1.msra.mxu0 0.0
    %503 = vmatprep.subr.mxu0 0.0
    %504 = vmatpush1.msra.mxu0 0.0
    %505 = vmatprep.subr.mxu0 0.0
    %506 = vmatpush1.msra.mxu0 0.0
    %507 = vmatprep.subr.mxu0 0.0
    %508 = vmatpush1.msra.mxu0 0.0
    %509 = vmatprep.subr.mxu0 0.0
    %510 = vmatpush1.msra.mxu0 0.0
    %511 = vmatprep.subr.mxu0 0.0
    %512 = vmatpush1.msra.mxu0 0.0
    %513 = vmatprep.subr.mxu0 0.0
    %514 = vmatpush1.msra.mxu0 0.0
    %515 = vmatprep.subr.mxu0 0.0
    %516 = vmatpush1.msra.mxu0 0.0
    %517 = vmatprep.subr.mxu0 0.0
    %518 = vmatpush1.msra.mxu0 0.0
    %519 = vmatprep.subr.mxu0 0.0
    %520 = vmatpush1.msra.mxu0 0.0
    %521 = vmatprep.subr.mxu0 0.0
    %522 = vmatpush1.msra.mxu0 0.0
    %523 = vmatprep.mubr.f32.mxu0 0.0
    %524 = vmatmul.mubr.f32.gmra.mrb[0].mxu0 %v458
    %v525 = vpop.f32.mrb[0].mxu0
    %v526 = vadd.f32 0.0, %v525
    %v527 = vpop.f32.mrb[0].mxu0
    %528 = vdwg.mxu0
    %v529 = vsub.f32 10.0, %v452
    %v530 = vmin.f32 %v526, %v529
    %v531 = vsub.f32 %v455, 0.2
    %v532 = vmax.f32 %v531, 0.0
    %v533 = vmul.f32 %v532, %v531
    %v534 = vmul.f32 %v533, 64.0
    %vm535 = vcmp.gt.f32.partialorder %v530, 0.0
    %v536 = vsub.f32 %v534, %v451
    %v537 = vmul.f32 %v536, 1.442695
    %v538 = vpow.pop %v537
    %v539 = vmul.f32 %v530, %v538
    %v540 = vsel %vm535, %v539, 0.0
    %v541 = vadd.f32 %v452, %v540
    %v542 = vadd.f32 %v452, %v530
    %v543 = vsel %vm456, -inf, %v453
    %544 = vmax.xlane.f32.xlu0 %v543
    %v545 = vpop.xlane.xlu0 %544
    %vm546 = vcmp.eq.f32.partialorder %v543, %v545
    %v547 = vsel %vm546, 1, 0
    %v548 = vcvt.s32.f32 %v547
    %549 = vmatprep.subr.mxu0 0.0
    %550 = vmatpush1.msra.mxu0 1.0
    %551 = vmatprep.subr.mxu0 0.0
    %552 = vmatpush1.msra.mxu0 1.0
    %553 = vmatprep.subr.mxu0 0.0
    %554 = vmatpush1.msra.mxu0 1.0
    %555 = vmatprep.subr.mxu0 0.0
    %556 = vmatpush1.msra.mxu0 1.0
    %557 = vmatprep.subr.mxu0 0.0
    %558 = vmatpush1.msra.mxu0 1.0
    %559 = vmatprep.subr.mxu0 0.0
    %560 = vmatpush1.msra.mxu0 1.0
    %561 = vmatprep.subr.mxu0 0.0
    %562 = vmatpush1.msra.mxu0 1.0
    %563 = vmatprep.subr.mxu0 0.0
    %564 = vmatpush1.msra.mxu0 1.0
    %565 = vmatprep.subr.mxu0 0.0
    %566 = vmatpush1.msra.mxu0 1.0
    %567 = vmatprep.subr.mxu0 0.0
    %568 = vmatpush1.msra.mxu0 1.0
    %569 = vmatprep.subr.mxu0 0.0
    %570 = vmatpush1.msra.mxu0 1.0
    %571 = vmatprep.subr.mxu0 0.0
    %572 = vmatpush1.msra.mxu0 1.0
    %573 = vmatprep.subr.mxu0 0.0
    %574 = vmatpush1.msra.mxu0 1.0
    %575 = vmatprep.subr.mxu0 0.0
    %576 = vmatpush1.msra.mxu0 1.0
    %577 = vmatprep.subr.mxu0 0.0
    %578 = vmatpush1.msra.mxu0 1.0
    %579 = vmatprep.subr.mxu0 0.0
    %580 = vmatpush1.msra.mxu0 1.0
    %581 = vmatprep.subr.mxu0 0.0
    %582 = vmatpush1.msra.mxu0 0.0
    %583 = vmatprep.subr.mxu0 0.0
    %584 = vmatpush1.msra.mxu0 0.0
    %585 = vmatprep.subr.mxu0 0.0
    %586 = vmatpush1.msra.mxu0 0.0
    %587 = vmatprep.subr.mxu0 0.0
    %588 = vmatpush1.msra.mxu0 0.0
    %589 = vmatprep.subr.mxu0 0.0
    %590 = vmatpush1.msra.mxu0 0.0
    %591 = vmatprep.subr.mxu0 0.0
    %592 = vmatpush1.msra.mxu0 0.0
    %593 = vmatprep.subr.mxu0 0.0
    %594 = vmatpush1.msra.mxu0 0.0
    %595 = vmatprep.subr.mxu0 0.0
    %596 = vmatpush1.msra.mxu0 0.0
    %597 = vmatprep.subr.mxu0 0.0
    %598 = vmatpush1.msra.mxu0 0.0
    %599 = vmatprep.subr.mxu0 0.0
    %600 = vmatpush1.msra.mxu0 0.0
    %601 = vmatprep.subr.mxu0 0.0
    %602 = vmatpush1.msra.mxu0 0.0
    %603 = vmatprep.subr.mxu0 0.0
    %604 = vmatpush1.msra.mxu0 0.0
    %605 = vmatprep.subr.mxu0 0.0
    %606 = vmatpush1.msra.mxu0 0.0
    %607 = vmatprep.subr.mxu0 0.0
    %608 = vmatpush1.msra.mxu0 0.0
    %609 = vmatprep.subr.mxu0 0.0
    %610 = vmatpush1.msra.mxu0 0.0
    %611 = vmatprep.subr.mxu0 0.0
    %612 = vmatpush1.msra.mxu0 0.0
    %613 = vmatprep.mubr.f32.mxu0 0.0
    %614 = vmatmul.mubr.f32.gmra.mrb[0].mxu0 %v548
    %v615 = vpop.f32.mrb[0].mxu0
    %v616 = vadd.f32 0.0, %v615
    %v617 = vpop.f32.mrb[0].mxu0
    %618 = vdwg.mxu0
    %v619 = vsub.f32 10.0, %v542
    %v620 = vmin.f32 %v616, %v619
    %v621 = vsub.f32 %v545, 0.2
    %v622 = vmax.f32 %v621, 0.0
    %v623 = vmul.f32 %v622, %v621
    %v624 = vmul.f32 %v623, 64.0
    %vm625 = vcmp.gt.f32.partialorder %v620, 0.0
    %v626 = vsub.f32 %v624, %v451
    %v627 = vmul.f32 %v626, 1.442695
    %v628 = vpow.pop %v627
    %v629 = vmul.f32 %v620, %v628
    %v630 = vsel %vm625, %v629, 0.0
    %v631 = vadd.f32 %v541, %v630
    %v632 = vadd.f32 %v542, %v620
    %v633 = vsel %vm546, -inf, %v543
    %634 = vmax.xlane.f32.xlu0 %v633
    %v635 = vpop.xlane.xlu0 %634
    %vm636 = vcmp.eq.f32.partialorder %v633, %v635
    %v637 = vsel %vm636, 1, 0
    %v638 = vcvt.s32.f32 %v637
    %639 = vmatprep.subr.mxu0 0.0
    %640 = vmatpush1.msra.mxu0 1.0
    %641 = vmatprep.subr.mxu0 0.0
    %642 = vmatpush1.msra.mxu0 1.0
    %643 = vmatprep.subr.mxu0 0.0
    %644 = vmatpush1.msra.mxu0 1.0
    %645 = vmatprep.subr.mxu0 0.0
    %646 = vmatpush1.msra.mxu0 1.0
    %647 = vmatprep.subr.mxu0 0.0
    %648 = vmatpush1.msra.mxu0 1.0
    %649 = vmatprep.subr.mxu0 0.0
    %650 = vmatpush1.msra.mxu0 1.0
    %651 = vmatprep.subr.mxu0 0.0
    %652 = vmatpush1.msra.mxu0 1.0
    %653 = vmatprep.subr.mxu0 0.0
    %654 = vmatpush1.msra.mxu0 1.0
    %655 = vmatprep.subr.mxu0 0.0
    %656 = vmatpush1.msra.mxu0 1.0
    %657 = vmatprep.subr.mxu0 0.0
    %658 = vmatpush1.msra.mxu0 1.0
    %659 = vmatprep.subr.mxu0 0.0
    %660 = vmatpush1.msra.mxu0 1.0
    %661 = vmatprep.subr.mxu0 0.0
    %662 = vmatpush1.msra.mxu0 1.0
    %663 = vmatprep.subr.mxu0 0.0
    %664 = vmatpush1.msra.mxu0 1.0
    %665 = vmatprep.subr.mxu0 0.0
    %666 = vmatpush1.msra.mxu0 1.0
    %667 = vmatprep.subr.mxu0 0.0
    %668 = vmatpush1.msra.mxu0 1.0
    %669 = vmatprep.subr.mxu0 0.0
    %670 = vmatpush1.msra.mxu0 1.0
    %671 = vmatprep.subr.mxu0 0.0
    %672 = vmatpush1.msra.mxu0 0.0
    %673 = vmatprep.subr.mxu0 0.0
    %674 = vmatpush1.msra.mxu0 0.0
    %675 = vmatprep.subr.mxu0 0.0
    %676 = vmatpush1.msra.mxu0 0.0
    %677 = vmatprep.subr.mxu0 0.0
    %678 = vmatpush1.msra.mxu0 0.0
    %679 = vmatprep.subr.mxu0 0.0
    %680 = vmatpush1.msra.mxu0 0.0
    %681 = vmatprep.subr.mxu0 0.0
    %682 = vmatpush1.msra.mxu0 0.0
    %683 = vmatprep.subr.mxu0 0.0
    %684 = vmatpush1.msra.mxu0 0.0
    %685 = vmatprep.subr.mxu0 0.0
    %686 = vmatpush1.msra.mxu0 0.0
    %687 = vmatprep.subr.mxu0 0.0
    %688 = vmatpush1.msra.mxu0 0.0
    %689 = vmatprep.subr.mxu0 0.0
    %690 = vmatpush1.msra.mxu0 0.0
    %691 = vmatprep.subr.mxu0 0.0
    %692 = vmatpush1.msra.mxu0 0.0
    %693 = vmatprep.subr.mxu0 0.0
    %694 = vmatpush1.msra.mxu0 0.0
    %695 = vmatprep.subr.mxu0 0.0
    %696 = vmatpush1.msra.mxu0 0.0
    %697 = vmatprep.subr.mxu0 0.0
    %698 = vmatpush1.msra.mxu0 0.0
    %699 = vmatprep.subr.mxu0 0.0
    %700 = vmatpush1.msra.mxu0 0.0
    %701 = vmatprep.subr.mxu0 0.0
    %702 = vmatpush1.msra.mxu0 0.0
    %703 = vmatprep.mubr.f32.mxu0 0.0
    %704 = vmatmul.mubr.f32.gmra.mrb[0].mxu0 %v638
    %v705 = vpop.f32.mrb[0].mxu0
    %v706 = vadd.f32 0.0, %v705
    %v707 = vpop.f32.mrb[0].mxu0
    %708 = vdwg.mxu0
    %v709 = vsub.f32 10.0, %v632
    %v710 = vmin.f32 %v706, %v709
    %v711 = vsub.f32 %v635, 0.2
    %v712 = vmax.f32 %v711, 0.0
    %v713 = vmul.f32 %v712, %v711
    %v714 = vmul.f32 %v713, 64.0
    %vm715 = vcmp.gt.f32.partialorder %v710, 0.0
    %v716 = vsub.f32 %v714, %v451
    %v717 = vmul.f32 %v716, 1.442695
    %v718 = vpow.pop %v717
    %v719 = vmul.f32 %v710, %v718
    %v720 = vsel %vm715, %v719, 0.0
    %v721 = vadd.f32 %v631, %v720
    %v722 = vadd.f32 %v632, %v710
    %v723 = vsel %vm636, -inf, %v633
    %724 = vmax.xlane.f32.xlu0 %v723
    %v725 = vpop.xlane.xlu0 %724
    %vm726 = vcmp.eq.f32.partialorder %v723, %v725
    %v727 = vsel %vm726, 1, 0
    %v728 = vcvt.s32.f32 %v727
    %729 = vmatprep.subr.mxu0 0.0
    %730 = vmatpush1.msra.mxu0 1.0
    %731 = vmatprep.subr.mxu0 0.0
    %732 = vmatpush1.msra.mxu0 1.0
    %733 = vmatprep.subr.mxu0 0.0
    %734 = vmatpush1.msra.mxu0 1.0
    %735 = vmatprep.subr.mxu0 0.0
    %736 = vmatpush1.msra.mxu0 1.0
    %737 = vmatprep.subr.mxu0 0.0
    %738 = vmatpush1.msra.mxu0 1.0
    %739 = vmatprep.subr.mxu0 0.0
    %740 = vmatpush1.msra.mxu0 1.0
    %741 = vmatprep.subr.mxu0 0.0
    %742 = vmatpush1.msra.mxu0 1.0
    %743 = vmatprep.subr.mxu0 0.0
    %744 = vmatpush1.msra.mxu0 1.0
    %745 = vmatprep.subr.mxu0 0.0
    %746 = vmatpush1.msra.mxu0 1.0
    %747 = vmatprep.subr.mxu0 0.0
    %748 = vmatpush1.msra.mxu0 1.0
    %749 = vmatprep.subr.mxu0 0.0
    %750 = vmatpush1.msra.mxu0 1.0
    %751 = vmatprep.subr.mxu0 0.0
    %752 = vmatpush1.msra.mxu0 1.0
    %753 = vmatprep.subr.mxu0 0.0
    %754 = vmatpush1.msra.mxu0 1.0
    %755 = vmatprep.subr.mxu0 0.0
    %756 = vmatpush1.msra.mxu0 1.0
    %757 = vmatprep.subr.mxu0 0.0
    %758 = vmatpush1.msra.mxu0 1.0
    %759 = vmatprep.subr.mxu0 0.0
    %760 = vmatpush1.msra.mxu0 1.0
    %761 = vmatprep.subr.mxu0 0.0
    %762 = vmatpush1.msra.mxu0 0.0
    %763 = vmatprep.subr.mxu0 0.0
    %764 = vmatpush1.msra.mxu0 0.0
    %765 = vmatprep.subr.mxu0 0.0
    %766 = vmatpush1.msra.mxu0 0.0
    %767 = vmatprep.subr.mxu0 0.0
    %768 = vmatpush1.msra.mxu0 0.0
    %769 = vmatprep.subr.mxu0 0.0
    %770 = vmatpush1.msra.mxu0 0.0
    %771 = vmatprep.subr.mxu0 0.0
    %772 = vmatpush1.msra.mxu0 0.0
    %773 = vmatprep.subr.mxu0 0.0
    %774 = vmatpush1.msra.mxu0 0.0
    %775 = vmatprep.subr.mxu0 0.0
    %776 = vmatpush1.msra.mxu0 0.0
    %777 = vmatprep.subr.mxu0 0.0
    %778 = vmatpush1.msra.mxu0 0.0
    %779 = vmatprep.subr.mxu0 0.0
    %780 = vmatpush1.msra.mxu0 0.0
    %781 = vmatprep.subr.mxu0 0.0
    %782 = vmatpush1.msra.mxu0 0.0
    %783 = vmatprep.subr.mxu0 0.0
    %784 = vmatpush1.msra.mxu0 0.0
    %785 = vmatprep.subr.mxu0 0.0
    %786 = vmatpush1.msra.mxu0 0.0
    %787 = vmatprep.subr.mxu0 0.0
    %788 = vmatpush1.msra.mxu0 0.0
    %789 = vmatprep.subr.mxu0 0.0
    %790 = vmatpush1.msra.mxu0 0.0
    %791 = vmatprep.subr.mxu0 0.0
    %792 = vmatpush1.msra.mxu0 0.0
    %793 = vmatprep.mubr.f32.mxu0 0.0
    %794 = vmatmul.mubr.f32.gmra.mrb[0].mxu0 %v728
    %v795 = vpop.f32.mrb[0].mxu0
    %v796 = vadd.f32 0.0, %v795
    %v797 = vpop.f32.mrb[0].mxu0
    %798 = vdwg.mxu0
    %v799 = vsub.f32 10.0, %v722
    %v800 = vmin.f32 %v796, %v799
    %v801 = vsub.f32 %v725, 0.2
    %v802 = vmax.f32 %v801, 0.0
    %v803 = vmul.f32 %v802, %v801
    %v804 = vmul.f32 %v803, 64.0
    %vm805 = vcmp.gt.f32.partialorder %v800, 0.0
    %v806 = vsub.f32 %v804, %v451
    %v807 = vmul.f32 %v806, 1.442695
    %v808 = vpow.pop %v807
    %v809 = vmul.f32 %v800, %v808
    %v810 = vsel %vm805, %v809, 0.0
    %v811 = vadd.f32 %v721, %v810
    %v812 = vadd.f32 %v722, %v800
    %v813 = vsel %vm726, -inf, %v723
    %814 = vmax.xlane.f32.xlu0 %v813
    %v815 = vpop.xlane.xlu0 %814
    %vm816 = vcmp.eq.f32.partialorder %v813, %v815
    %v817 = vsel %vm816, 1, 0
    %v818 = vcvt.s32.f32 %v817
    %819 = vmatprep.subr.mxu0 0.0
    %820 = vmatpush1.msra.mxu0 1.0
    %821 = vmatprep.subr.mxu0 0.0
    %822 = vmatpush1.msra.mxu0 1.0
    %823 = vmatprep.subr.mxu0 0.0
    %824 = vmatpush1.msra.mxu0 1.0
    %825 = vmatprep.subr.mxu0 0.0
    %826 = vmatpush1.msra.mxu0 1.0
    %827 = vmatprep.subr.mxu0 0.0
    %828 = vmatpush1.msra.mxu0 1.0
    %829 = vmatprep.subr.mxu0 0.0
    %830 = vmatpush1.msra.mxu0 1.0
    %831 = vmatprep.subr.mxu0 0.0
    %832 = vmatpush1.msra.mxu0 1.0
    %833 = vmatprep.subr.mxu0 0.0
    %834 = vmatpush1.msra.mxu0 1.0
    %835 = vmatprep.subr.mxu0 0.0
    %836 = vmatpush1.msra.mxu0 1.0
    %837 = vmatprep.subr.mxu0 0.0
    %838 = vmatpush1.msra.mxu0 1.0
    %839 = vmatprep.subr.mxu0 0.0
    %840 = vmatpush1.msra.mxu0 1.0
    %841 = vmatprep.subr.mxu0 0.0
    %842 = vmatpush1.msra.mxu0 1.0
    %843 = vmatprep.subr.mxu0 0.0
    %844 = vmatpush1.msra.mxu0 1.0
    %845 = vmatprep.subr.mxu0 0.0
    %846 = vmatpush1.msra.mxu0 1.0
    %847 = vmatprep.subr.mxu0 0.0
    %848 = vmatpush1.msra.mxu0 1.0
    %849 = vmatprep.subr.mxu0 0.0
    %850 = vmatpush1.msra.mxu0 1.0
    %851 = vmatprep.subr.mxu0 0.0
    %852 = vmatpush1.msra.mxu0 0.0
    %853 = vmatprep.subr.mxu0 0.0
    %854 = vmatpush1.msra.mxu0 0.0
    %855 = vmatprep.subr.mxu0 0.0
    %856 = vmatpush1.msra.mxu0 0.0
    %857 = vmatprep.subr.mxu0 0.0
    %858 = vmatpush1.msra.mxu0 0.0
    %859 = vmatprep.subr.mxu0 0.0
    %860 = vmatpush1.msra.mxu0 0.0
    %861 = vmatprep.subr.mxu0 0.0
    %862 = vmatpush1.msra.mxu0 0.0
    %863 = vmatprep.subr.mxu0 0.0
    %864 = vmatpush1.msra.mxu0 0.0
    %865 = vmatprep.subr.mxu0 0.0
    %866 = vmatpush1.msra.mxu0 0.0
    %867 = vmatprep.subr.mxu0 0.0
    %868 = vmatpush1.msra.mxu0 0.0
    %869 = vmatprep.subr.mxu0 0.0
    %870 = vmatpush1.msra.mxu0 0.0
    %871 = vmatprep.subr.mxu0 0.0
    %872 = vmatpush1.msra.mxu0 0.0
    %873 = vmatprep.subr.mxu0 0.0
    %874 = vmatpush1.msra.mxu0 0.0
    %875 = vmatprep.subr.mxu0 0.0
    %876 = vmatpush1.msra.mxu0 0.0
    %877 = vmatprep.subr.mxu0 0.0
    %878 = vmatpush1.msra.mxu0 0.0
    %879 = vmatprep.subr.mxu0 0.0
    %880 = vmatpush1.msra.mxu0 0.0
    %881 = vmatprep.subr.mxu0 0.0
    %882 = vmatpush1.msra.mxu0 0.0
    %883 = vmatprep.mubr.f32.mxu0 0.0
    %884 = vmatmul.mubr.f32.gmra.mrb[0].mxu0 %v818
    %v885 = vpop.f32.mrb[0].mxu0
    %v886 = vadd.f32 0.0, %v885
    %v887 = vpop.f32.mrb[0].mxu0
    %888 = vdwg.mxu0
    %v889 = vsub.f32 10.0, %v812
    %v890 = vmin.f32 %v886, %v889
    %v891 = vsub.f32 %v815, 0.2
    %v892 = vmax.f32 %v891, 0.0
    %v893 = vmul.f32 %v892, %v891
    %v894 = vmul.f32 %v893, 64.0
    %vm895 = vcmp.gt.f32.partialorder %v890, 0.0
    %v896 = vsub.f32 %v894, %v451
    %v897 = vmul.f32 %v896, 1.442695
    %v898 = vpow.pop %v897
    %v899 = vmul.f32 %v890, %v898
    %v900 = vsel %vm895, %v899, 0.0
    %v901 = vadd.f32 %v811, %v900
    %v902 = vadd.f32 %v812, %v890
    %v903 = vsel %vm816, -inf, %v813
    %904 = vmax.xlane.f32.xlu0 %v903
    %v905 = vpop.xlane.xlu0 %904
    %vm906 = vcmp.eq.f32.partialorder %v903, %v905
    %v907 = vsel %vm906, 1, 0
    %v908 = vcvt.s32.f32 %v907
    %909 = vmatprep.subr.mxu0 0.0
    %910 = vmatpush1.msra.mxu0 1.0
    %911 = vmatprep.subr.mxu0 0.0
    %912 = vmatpush1.msra.mxu0 1.0
    %913 = vmatprep.subr.mxu0 0.0
    %914 = vmatpush1.msra.mxu0 1.0
    %915 = vmatprep.subr.mxu0 0.0
    %916 = vmatpush1.msra.mxu0 1.0
    %917 = vmatprep.subr.mxu0 0.0
    %918 = vmatpush1.msra.mxu0 1.0
    %919 = vmatprep.subr.mxu0 0.0
    %920 = vmatpush1.msra.mxu0 1.0
    %921 = vmatprep.subr.mxu0 0.0
    %922 = vmatpush1.msra.mxu0 1.0
    %923 = vmatprep.subr.mxu0 0.0
    %924 = vmatpush1.msra.mxu0 1.0
    %925 = vmatprep.subr.mxu0 0.0
    %926 = vmatpush1.msra.mxu0 1.0
    %927 = vmatprep.subr.mxu0 0.0
    %928 = vmatpush1.msra.mxu0 1.0
    %929 = vmatprep.subr.mxu0 0.0
    %930 = vmatpush1.msra.mxu0 1.0
    %931 = vmatprep.subr.mxu0 0.0
    %932 = vmatpush1.msra.mxu0 1.0
    %933 = vmatprep.subr.mxu0 0.0
    %934 = vmatpush1.msra.mxu0 1.0
    %935 = vmatprep.subr.mxu0 0.0
    %936 = vmatpush1.msra.mxu0 1.0
    %937 = vmatprep.subr.mxu0 0.0
    %938 = vmatpush1.msra.mxu0 1.0
    %939 = vmatprep.subr.mxu0 0.0
    %940 = vmatpush1.msra.mxu0 1.0
    %941 = vmatprep.subr.mxu0 0.0
    %942 = vmatpush1.msra.mxu0 0.0
    %943 = vmatprep.subr.mxu0 0.0
    %944 = vmatpush1.msra.mxu0 0.0
    %945 = vmatprep.subr.mxu0 0.0
    %946 = vmatpush1.msra.mxu0 0.0
    %947 = vmatprep.subr.mxu0 0.0
    %948 = vmatpush1.msra.mxu0 0.0
    %949 = vmatprep.subr.mxu0 0.0
    %950 = vmatpush1.msra.mxu0 0.0
    %951 = vmatprep.subr.mxu0 0.0
    %952 = vmatpush1.msra.mxu0 0.0
    %953 = vmatprep.subr.mxu0 0.0
    %954 = vmatpush1.msra.mxu0 0.0
    %955 = vmatprep.subr.mxu0 0.0
    %956 = vmatpush1.msra.mxu0 0.0
    %957 = vmatprep.subr.mxu0 0.0
    %958 = vmatpush1.msra.mxu0 0.0
    %959 = vmatprep.subr.mxu0 0.0
    %960 = vmatpush1.msra.mxu0 0.0
    %961 = vmatprep.subr.mxu0 0.0
    %962 = vmatpush1.msra.mxu0 0.0
    %963 = vmatprep.subr.mxu0 0.0
    %964 = vmatpush1.msra.mxu0 0.0
    %965 = vmatprep.subr.mxu0 0.0
    %966 = vmatpush1.msra.mxu0 0.0
    %967 = vmatprep.subr.mxu0 0.0
    %968 = vmatpush1.msra.mxu0 0.0
    %969 = vmatprep.subr.mxu0 0.0
    %970 = vmatpush1.msra.mxu0 0.0
    %971 = vmatprep.subr.mxu0 0.0
    %972 = vmatpush1.msra.mxu0 0.0
    %973 = vmatprep.mubr.f32.mxu0 0.0
    %974 = vmatmul.mubr.f32.gmra.mrb[0].mxu0 %v908
    %v975 = vpop.f32.mrb[0].mxu0
    %v976 = vadd.f32 0.0, %v975
    %v977 = vpop.f32.mrb[0].mxu0
    %978 = vdwg.mxu0
    %v979 = vsub.f32 10.0, %v902
    %v980 = vmin.f32 %v976, %v979
    %v981 = vsub.f32 %v905, 0.2
    %v982 = vmax.f32 %v981, 0.0
    %v983 = vmul.f32 %v982, %v981
    %v984 = vmul.f32 %v983, 64.0
    %vm985 = vcmp.gt.f32.partialorder %v980, 0.0
    %v986 = vsub.f32 %v984, %v451
    %v987 = vmul.f32 %v986, 1.442695
    %v988 = vpow.pop %v987
    %v989 = vmul.f32 %v980, %v988
    %v990 = vsel %vm985, %v989, 0.0
    %v991 = vadd.f32 %v901, %v990
    %v992 = vadd.f32 %v902, %v980
    %v993 = vsel %vm906, -inf, %v903
    %994 = vmax.xlane.f32.xlu0 %v993
    %v995 = vpop.xlane.xlu0 %994
    %vm996 = vcmp.eq.f32.partialorder %v993, %v995
    %v997 = vsel %vm996, 1, 0
    %v998 = vcvt.s32.f32 %v997
    %999 = vmatprep.subr.mxu0 0.0
    %1000 = vmatpush1.msra.mxu0 1.0
    %1001 = vmatprep.subr.mxu0 0.0
    %1002 = vmatpush1.msra.mxu0 1.0
    %1003 = vmatprep.subr.mxu0 0.0
    %1004 = vmatpush1.msra.mxu0 1.0
    %1005 = vmatprep.subr.mxu0 0.0
    %1006 = vmatpush1.msra.mxu0 1.0
    %1007 = vmatprep.subr.mxu0 0.0
    %1008 = vmatpush1.msra.mxu0 1.0
    %1009 = vmatprep.subr.mxu0 0.0
    %1010 = vmatpush1.msra.mxu0 1.0
    %1011 = vmatprep.subr.mxu0 0.0
    %1012 = vmatpush1.msra.mxu0 1.0
    %1013 = vmatprep.subr.mxu0 0.0
    %1014 = vmatpush1.msra.mxu0 1.0
    %1015 = vmatprep.subr.mxu0 0.0
    %1016 = vmatpush1.msra.mxu0 1.0
    %1017 = vmatprep.subr.mxu0 0.0
    %1018 = vmatpush1.msra.mxu0 1.0
    %1019 = vmatprep.subr.mxu0 0.0
    %1020 = vmatpush1.msra.mxu0 1.0
    %1021 = vmatprep.subr.mxu0 0.0
    %1022 = vmatpush1.msra.mxu0 1.0
    %1023 = vmatprep.subr.mxu0 0.0
    %1024 = vmatpush1.msra.mxu0 1.0
    %1025 = vmatprep.subr.mxu0 0.0
    %1026 = vmatpush1.msra.mxu0 1.0
    %1027 = vmatprep.subr.mxu0 0.0
    %1028 = vmatpush1.msra.mxu0 1.0
    %1029 = vmatprep.subr.mxu0 0.0
    %1030 = vmatpush1.msra.mxu0 1.0
    %1031 = vmatprep.subr.mxu0 0.0
    %1032 = vmatpush1.msra.mxu0 0.0
    %1033 = vmatprep.subr.mxu0 0.0
    %1034 = vmatpush1.msra.mxu0 0.0
    %1035 = vmatprep.subr.mxu0 0.0
    %1036 = vmatpush1.msra.mxu0 0.0
    %1037 = vmatprep.subr.mxu0 0.0
    %1038 = vmatpush1.msra.mxu0 0.0
    %1039 = vmatprep.subr.mxu0 0.0
    %1040 = vmatpush1.msra.mxu0 0.0
    %1041 = vmatprep.subr.mxu0 0.0
    %1042 = vmatpush1.msra.mxu0 0.0
    %1043 = vmatprep.subr.mxu0 0.0
    %1044 = vmatpush1.msra.mxu0 0.0
    %1045 = vmatprep.subr.mxu0 0.0
    %1046 = vmatpush1.msra.mxu0 0.0
    %1047 = vmatprep.subr.mxu0 0.0
    %1048 = vmatpush1.msra.mxu0 0.0
    %1049 = vmatprep.subr.mxu0 0.0
    %1050 = vmatpush1.msra.mxu0 0.0
    %1051 = vmatprep.subr.mxu0 0.0
    %1052 = vmatpush1.msra.mxu0 0.0
    %1053 = vmatprep.subr.mxu0 0.0
    %1054 = vmatpush1.msra.mxu0 0.0
    %1055 = vmatprep.subr.mxu0 0.0
    %1056 = vmatpush1.msra.mxu0 0.0
    %1057 = vmatprep.subr.mxu0 0.0
    %1058 = vmatpush1.msra.mxu0 0.0
    %1059 = vmatprep.subr.mxu0 0.0
    %1060 = vmatpush1.msra.mxu0 0.0
    %1061 = vmatprep.subr.mxu0 0.0
    %1062 = vmatpush1.msra.mxu0 0.0
    %1063 = vmatprep.mubr.f32.mxu0 0.0
    %1064 = vmatmul.mubr.f32.gmra.mrb[0].mxu0 %v998
    %v1065 = vpop.f32.mrb[0].mxu0
    %v1066 = vadd.f32 0.0, %v1065
    %v1067 = vpop.f32.mrb[0].mxu0
    %1068 = vdwg.mxu0
    %v1069 = vsub.f32 10.0, %v992
    %v1070 = vmin.f32 %v1066, %v1069
    %v1071 = vsub.f32 %v995, 0.2
    %v1072 = vmax.f32 %v1071, 0.0
    %v1073 = vmul.f32 %v1072, %v1071
    %v1074 = vmul.f32 %v1073, 64.0
    %vm1075 = vcmp.gt.f32.partialorder %v1070, 0.0
    %v1076 = vsub.f32 %v1074, %v451
    %v1077 = vmul.f32 %v1076, 1.442695
    %v1078 = vpow.pop %v1077
    %v1079 = vmul.f32 %v1070, %v1078
    %v1080 = vsel %vm1075, %v1079, 0.0
    %v1081 = vadd.f32 %v991, %v1080
    %v1082 = vadd.f32 %v992, %v1070
    %v1083 = vsel %vm996, -inf, %v993
    %1084 = vmax.xlane.f32.xlu0 %v1083
    %v1085 = vpop.xlane.xlu0 %1084
    %vm1086 = vcmp.eq.f32.partialorder %v1083, %v1085
    %v1087 = vsel %vm1086, 1, 0
    %v1088 = vcvt.s32.f32 %v1087
    %1089 = vmatprep.subr.mxu0 0.0
    %1090 = vmatpush1.msra.mxu0 1.0
    %1091 = vmatprep.subr.mxu0 0.0
    %1092 = vmatpush1.msra.mxu0 1.0
    %1093 = vmatprep.subr.mxu0 0.0
    %1094 = vmatpush1.msra.mxu0 1.0
    %1095 = vmatprep.subr.mxu0 0.0
    %1096 = vmatpush1.msra.mxu0 1.0
    %1097 = vmatprep.subr.mxu0 0.0
    %1098 = vmatpush1.msra.mxu0 1.0
    %1099 = vmatprep.subr.mxu0 0.0
    %1100 = vmatpush1.msra.mxu0 1.0
    %1101 = vmatprep.subr.mxu0 0.0
    %1102 = vmatpush1.msra.mxu0 1.0
    %1103 = vmatprep.subr.mxu0 0.0
    %1104 = vmatpush1.msra.mxu0 1.0
    %1105 = vmatprep.subr.mxu0 0.0
    %1106 = vmatpush1.msra.mxu0 1.0
    %1107 = vmatprep.subr.mxu0 0.0
    %1108 = vmatpush1.msra.mxu0 1.0
    %1109 = vmatprep.subr.mxu0 0.0
    %1110 = vmatpush1.msra.mxu0 1.0
    %1111 = vmatprep.subr.mxu0 0.0
    %1112 = vmatpush1.msra.mxu0 1.0
    %1113 = vmatprep.subr.mxu0 0.0
    %1114 = vmatpush1.msra.mxu0 1.0
    %1115 = vmatprep.subr.mxu0 0.0
    %1116 = vmatpush1.msra.mxu0 1.0
    %1117 = vmatprep.subr.mxu0 0.0
    %1118 = vmatpush1.msra.mxu0 1.0
    %1119 = vmatprep.subr.mxu0 0.0
    %1120 = vmatpush1.msra.mxu0 1.0
    %1121 = vmatprep.subr.mxu0 0.0
    %1122 = vmatpush1.msra.mxu0 0.0
    %1123 = vmatprep.subr.mxu0 0.0
    %1124 = vmatpush1.msra.mxu0 0.0
    %1125 = vmatprep.subr.mxu0 0.0
    %1126 = vmatpush1.msra.mxu0 0.0
    %1127 = vmatprep.subr.mxu0 0.0
    %1128 = vmatpush1.msra.mxu0 0.0
    %1129 = vmatprep.subr.mxu0 0.0
    %1130 = vmatpush1.msra.mxu0 0.0
    %1131 = vmatprep.subr.mxu0 0.0
    %1132 = vmatpush1.msra.mxu0 0.0
    %1133 = vmatprep.subr.mxu0 0.0
    %1134 = vmatpush1.msra.mxu0 0.0
    %1135 = vmatprep.subr.mxu0 0.0
    %1136 = vmatpush1.msra.mxu0 0.0
    %1137 = vmatprep.subr.mxu0 0.0
    %1138 = vmatpush1.msra.mxu0 0.0
    %1139 = vmatprep.subr.mxu0 0.0
    %1140 = vmatpush1.msra.mxu0 0.0
    %1141 = vmatprep.subr.mxu0 0.0
    %1142 = vmatpush1.msra.mxu0 0.0
    %1143 = vmatprep.subr.mxu0 0.0
    %1144 = vmatpush1.msra.mxu0 0.0
    %1145 = vmatprep.subr.mxu0 0.0
    %1146 = vmatpush1.msra.mxu0 0.0
    %1147 = vmatprep.subr.mxu0 0.0
    %1148 = vmatpush1.msra.mxu0 0.0
    %1149 = vmatprep.subr.mxu0 0.0
    %1150 = vmatpush1.msra.mxu0 0.0
    %1151 = vmatprep.subr.mxu0 0.0
    %1152 = vmatpush1.msra.mxu0 0.0
    %1153 = vmatprep.mubr.f32.mxu0 0.0
    %1154 = vmatmul.mubr.f32.gmra.mrb[0].mxu0 %v1088
    %v1155 = vpop.f32.mrb[0].mxu0
    %v1156 = vadd.f32 0.0, %v1155
    %v1157 = vpop.f32.mrb[0].mxu0
    %1158 = vdwg.mxu0
    %v1159 = vsub.f32 10.0, %v1082
    %v1160 = vmin.f32 %v1156, %v1159
    %v1161 = vsub.f32 %v1085, 0.2
    %v1162 = vmax.f32 %v1161, 0.0
    %v1163 = vmul.f32 %v1162, %v1161
    %v1164 = vmul.f32 %v1163, 64.0
    %vm1165 = vcmp.gt.f32.partialorder %v1160, 0.0
    %v1166 = vsub.f32 %v1164, %v451
    %v1167 = vmul.f32 %v1166, 1.442695
    %v1168 = vpow.pop %v1167
    %v1169 = vmul.f32 %v1160, %v1168
    %v1170 = vsel %vm1165, %v1169, 0.0
    %v1171 = vadd.f32 %v1081, %v1170
    %v1172 = vadd.f32 %v1082, %v1160
    %v1173 = vsel %vm1086, -inf, %v1083
    %1174 = vmax.xlane.f32.xlu0 %v1173
    %v1175 = vpop.xlane.xlu0 %1174
    %vm1176 = vcmp.eq.f32.partialorder %v1173, %v1175
    %v1177 = vsel %vm1176, 1, 0
    %v1178 = vcvt.s32.f32 %v1177
    %1179 = vmatprep.subr.mxu0 0.0
    %1180 = vmatpush1.msra.mxu0 1.0
    %1181 = vmatprep.subr.mxu0 0.0
    %1182 = vmatpush1.msra.mxu0 1.0
    %1183 = vmatprep.subr.mxu0 0.0
    %1184 = vmatpush1.msra.mxu0 1.0
    %1185 = vmatprep.subr.mxu0 0.0
    %1186 = vmatpush1.msra.mxu0 1.0
    %1187 = vmatprep.subr.mxu0 0.0
    %1188 = vmatpush1.msra.mxu0 1.0
    %1189 = vmatprep.subr.mxu0 0.0
    %1190 = vmatpush1.msra.mxu0 1.0
    %1191 = vmatprep.subr.mxu0 0.0
    %1192 = vmatpush1.msra.mxu0 1.0
    %1193 = vmatprep.subr.mxu0 0.0
    %1194 = vmatpush1.msra.mxu0 1.0
    %1195 = vmatprep.subr.mxu0 0.0
    %1196 = vmatpush1.msra.mxu0 1.0
    %1197 = vmatprep.subr.mxu0 0.0
    %1198 = vmatpush1.msra.mxu0 1.0
    %1199 = vmatprep.subr.mxu0 0.0
    %1200 = vmatpush1.msra.mxu0 1.0
    %1201 = vmatprep.subr.mxu0 0.0
    %1202 = vmatpush1.msra.mxu0 1.0
    %1203 = vmatprep.subr.mxu0 0.0
    %1204 = vmatpush1.msra.mxu0 1.0
    %1205 = vmatprep.subr.mxu0 0.0
    %1206 = vmatpush1.msra.mxu0 1.0
    %1207 = vmatprep.subr.mxu0 0.0
    %1208 = vmatpush1.msra.mxu0 1.0
    %1209 = vmatprep.subr.mxu0 0.0
    %1210 = vmatpush1.msra.mxu0 1.0
    %1211 = vmatprep.subr.mxu0 0.0
    %1212 = vmatpush1.msra.mxu0 0.0
    %1213 = vmatprep.subr.mxu0 0.0
    %1214 = vmatpush1.msra.mxu0 0.0
    %1215 = vmatprep.subr.mxu0 0.0
    %1216 = vmatpush1.msra.mxu0 0.0
    %1217 = vmatprep.subr.mxu0 0.0
    %1218 = vmatpush1.msra.mxu0 0.0
    %1219 = vmatprep.subr.mxu0 0.0
    %1220 = vmatpush1.msra.mxu0 0.0
    %1221 = vmatprep.subr.mxu0 0.0
    %1222 = vmatpush1.msra.mxu0 0.0
    %1223 = vmatprep.subr.mxu0 0.0
    %1224 = vmatpush1.msra.mxu0 0.0
    %1225 = vmatprep.subr.mxu0 0.0
    %1226 = vmatpush1.msra.mxu0 0.0
    %1227 = vmatprep.subr.mxu0 0.0
    %1228 = vmatpush1.msra.mxu0 0.0
    %1229 = vmatprep.subr.mxu0 0.0
    %1230 = vmatpush1.msra.mxu0 0.0
    %1231 = vmatprep.subr.mxu0 0.0
    %1232 = vmatpush1.msra.mxu0 0.0
    %1233 = vmatprep.subr.mxu0 0.0
    %1234 = vmatpush1.msra.mxu0 0.0
    %1235 = vmatprep.subr.mxu0 0.0
    %1236 = vmatpush1.msra.mxu0 0.0
    %1237 = vmatprep.subr.mxu0 0.0
    %1238 = vmatpush1.msra.mxu0 0.0
    %1239 = vmatprep.subr.mxu0 0.0
    %1240 = vmatpush1.msra.mxu0 0.0
    %1241 = vmatprep.subr.mxu0 0.0
    %1242 = vmatpush1.msra.mxu0 0.0
    %1243 = vmatprep.mubr.f32.mxu0 0.0
    %1244 = vmatmul.mubr.f32.gmra.mrb[0].mxu0 %v1178
    %v1245 = vpop.f32.mrb[0].mxu0
    %v1246 = vadd.f32 0.0, %v1245
    %v1247 = vpop.f32.mrb[0].mxu0
    %1248 = vdwg.mxu0
    %v1249 = vsub.f32 10.0, %v1172
    %v1250 = vmin.f32 %v1246, %v1249
    %v1251 = vsub.f32 %v1175, 0.2
    %v1252 = vmax.f32 %v1251, 0.0
    %v1253 = vmul.f32 %v1252, %v1251
    %v1254 = vmul.f32 %v1253, 64.0
    %vm1255 = vcmp.gt.f32.partialorder %v1250, 0.0
    %v1256 = vsub.f32 %v1254, %v451
    %v1257 = vmul.f32 %v1256, 1.442695
    %v1258 = vpow.pop %v1257
    %v1259 = vmul.f32 %v1250, %v1258
    %v1260 = vsel %vm1255, %v1259, 0.0
    %v1261 = vadd.f32 %v1171, %v1260
    %v1262 = vlog2.pop %v1261
    %v1263 = vmul.f32 %v1262, 0.6931472
    %v1264 = vadd.f32 %v451, %v1263
    %v1265 = vsel %vm283, %v1264, %v370
    %v1266 = vadd.f32 %v1265, %v204
    %v1267 = vmax.f32 %v1266, 0.0
    %v1268 = vand.u32 2147483647, %v1266
    %v1269 = vsub.f32 0.0, %v1268
    %v1270 = vmul.f32 %v1269, 1.442695
    %v1271 = vpow.pop %v1270
    %v1272 = vadd.f32 %v1271, 1.0
    %v1273 = vlog2.pop %v1272
    %v1274 = vmul.f32 %v1273, 0.6931472
    %v1275 = vmul.f32 -0.5, %v1271
    %v1276 = vadd.f32 %v1275, 1.0
    %v1277 = vmul.f32 %v1276, %v1271
    %v1278 = vand.u32 2147483647, %v1271
    %vm1279 = vcmp.lt.f32.partialorder %v1278, 0.0004427343
    %v1280 = vsel %vm1279, %v1277, %v1274
    %v1281 = vadd.f32 %v1267, %v1280
    %vm1282 = vcmask 7168
    %v1283 = vsel %vm1282, %v1281, 0.0
    %v1284 = vrot.slane %v1283, 4
    %v1285 = vadd.f32 %v1283, %v1284
    %v1286 = vrot.slane %v1285, 2
    %v1287 = vadd.f32 %v1285, %v1286
    %v1288 = vrot.slane %v1287, 1
    %v1289 = vadd.f32 %v1287, %v1288
    %1291 = vset.pattern.permute.xlu0 0
    %1292 = vperm.xlu0 %1291, %v1289
    %v1293 = vpop.permute.xlu0 %1292
    %1295 = vst [vmem:[#allocation7] sm:$0xff] %v1293
    // Predicated region
    $region18: #{tpu_custom_call.1} parent=1 // pred_check
      _
    $region19: #{tpu_custom_call.1} parent=1 // pred_check_branch
      %1297 = sbr.rel (0) target = $region21
    $region20: #{tpu_custom_call.1} parent=1 // pred_region
      %s1299 = ssub.s32 128, 128
      %1300 = vsyncadd [#allocation4], %s1299
      %s1302 = sshll.u32 [#allocation7], 4
      %s1303 = int_to_ptr.vmem [resolvable:$true] %s1302
      %1305 = dma.vmem_to_hbm [thread:$0]  %s1303, 128, %s2, [#allocation4]
    $region21: #{tpu_custom_call.1} parent=1 // pred_fallthru
      _
    // Predicated region
    $region22: #{tpu_custom_call.1} parent=1 // pred_check
      _
    $region23: #{tpu_custom_call.1} parent=1 // pred_check_branch
      %1307 = sbr.rel (0) target = $region25
    $region24: #{tpu_custom_call.1} parent=1 // pred_region
      %1308 = dma.done [#allocation4], 128
    $region25: #{tpu_custom_call.1} parent=1 // pred_fallthru
      _
    %1309 = vsyncpa [#allocation3], 1
    %1310 = vsyncpa [#allocation6], 1
    %1311 = vsyncpa [#allocation4], 1

</llo_original>
